<compile_context>
chip_gen: v7x
topology: tpu7x:2x2x1
jax: 0.10.0
libtpu: 0.0.40
codegen_flags: <defaults>
</compile_context>

<pallas_src>
import functools
import math

import jax
import jax.numpy as jnp
from jax.experimental import pallas as pl
from jax.experimental.pallas import tpu as pltpu

EPS = 1e-5
HIDDEN = 512


def _round_up(x, m):
    return (x + m - 1) // m * m


# --------------------------------------------------------------------------
# Kernels
# --------------------------------------------------------------------------

def _linear_stats_kernel(x_ref, w_ref, y_ref, sum_ref, ssq_ref):
    """y = x @ W (bf16 MXU, f32 acc); accumulate per-feature sum / sum(y^2)."""
    y = jnp.dot(x_ref[...], w_ref[...], preferred_element_type=jnp.float32)
    y_ref[...] = y

    @pl.when(pl.program_id(0) == 0)
    def _init():
        sum_ref[...] = jnp.zeros_like(sum_ref)
        ssq_ref[...] = jnp.zeros_like(ssq_ref)

    sum_ref[...] += jnp.sum(y, axis=0, keepdims=True)
    ssq_ref[...] += jnp.sum(y * y, axis=0, keepdims=True)


def _bn_relu_linear_stats_kernel(y_in_ref, scale_ref, shift_ref, w_ref,
                                 y_out_ref, sum_ref, ssq_ref,
                                 *, tile_batch, num_rows, padded_rows):
    """h = relu(y*scale + shift); y_out = h @ W; accumulate stats of y_out."""
    h = jnp.maximum(y_in_ref[...] * scale_ref[...] + shift_ref[...], 0.0)

    if padded_rows != num_rows:
        # Zero batch-padding rows so they contribute nothing to this layer's
        # output or to the next layer's batch statistics.
        row = (pl.program_id(0) * tile_batch
               + jax.lax.broadcasted_iota(jnp.int32, h.shape, 0))
        h = jnp.where(row < num_rows, h, 0.0)

    y = jnp.dot(h.astype(w_ref.dtype), w_ref[...],
                preferred_element_type=jnp.float32)
    y_out_ref[...] = y

    @pl.when(pl.program_id(0) == 0)
    def _init():
        sum_ref[...] = jnp.zeros_like(sum_ref)
        ssq_ref[...] = jnp.zeros_like(ssq_ref)

    sum_ref[...] += jnp.sum(y, axis=0, keepdims=True)
    ssq_ref[...] += jnp.sum(y * y, axis=0, keepdims=True)


def _bn_relu_linear_out_kernel(y_in_ref, scale_ref, shift_ref, w_ref, b_ref,
                               out_ref):
    """out = relu(y*scale + shift) @ W3 + b3 (lane-dense padded output)."""
    h = jnp.maximum(y_in_ref[...] * scale_ref[...] + shift_ref[...], 0.0)
    out = jnp.dot(h.astype(w_ref.dtype), w_ref[...],
                  preferred_element_type=jnp.float32)
    out_ref[...] = out + b_ref[...]


# --------------------------------------------------------------------------
# Wrapper
# --------------------------------------------------------------------------

@functools.partial(jax.jit, static_argnames=("output_shape", "block_batch"))
def generator_forward(noise, condition, params, output_shape, block_batch=512):
    """Pallas implementation of Generator.forward.

    noise:     (B, latent_dim) f32
    condition: (B, cond_dim)   f32
    params:    dict from init_generator_params (bf16 weights, f32 BN params)
    returns:   (B, *output_shape) f32
    """
    f32 = jnp.float32
    B = noise.shape[0]
    in_dim = noise.shape[1] + condition.shape[1]
    out_dim = math.prod(output_shape)

    hidden = params["w2"].shape[0]          # 512
    k_in = params["w1"].shape[0]            # in_dim padded to 128
    k_out = params["w3"].shape[1]           # out_dim padded to 128

    # Batch tiling (tile multiple of 8 sublanes; pad B up to a whole tile).
    tb = min(_round_up(block_batch, 8), _round_up(B, 8))
    b_pad = _round_up(B, tb)
    nb = b_pad // tb

    # Assemble + pad the kernel input once (lane-dense K), cast to bf16.
    x = jnp.concatenate([noise, condition], axis=1)
    x = jnp.pad(x, ((0, b_pad - B), (0, k_in - in_dim))).astype(jnp.bfloat16)

    row_spec = lambda f: pl.BlockSpec((tb, f), lambda i: (i, 0))
    vec_spec = lambda f: pl.BlockSpec((1, f), lambda i: (0, 0))
    mat_spec = lambda r, c: pl.BlockSpec((r, c), lambda i: (0, 0))

    # ---- Layer 1: x @ W1, plus batch statistics of the pre-activations ----
    y1, s1, ss1 = pl.pallas_call(
        _linear_stats_kernel,
        grid=(nb,),
        in_specs=[row_spec(k_in), mat_spec(k_in, hidden)],
        out_specs=(row_spec(hidden), vec_spec(hidden), vec_spec(hidden)),
        out_shape=(jax.ShapeDtypeStruct((b_pad, hidden), f32),
                   jax.ShapeDtypeStruct((1, hidden), f32),
                   jax.ShapeDtypeStruct((1, hidden), f32)),
        compiler_params=pltpu.CompilerParams(
            dimension_semantics=("arbitrary",)),
        cost_estimate=pl.CostEstimate(
            flops=2 * b_pad * k_in * hidden,
            transcendentals=0,
            bytes_accessed=(b_pad * k_in * 2 + k_in * hidden * 2
                            + b_pad * hidden * 4)),
    )(x, params["w1"])

    # Fold BN (training mode, biased variance) into per-feature scale/shift.
    inv_b = 1.0 / B

    def _fold(s, ss, gamma, beta):
        mean = s * inv_b
        var = jnp.maximum(ss * inv_b - mean * mean, 0.0)
        scale = gamma * jax.lax.rsqrt(var + EPS)
        return scale, beta - mean * scale

    scale1, shift1 = _fold(s1, ss1, params["g1"], params["be1"])

    # ---- Layer 2: relu(bn(y1)) @ W2, plus batch statistics ----
    layer2 = functools.partial(_bn_relu_linear_stats_kernel,
                               tile_batch=tb, num_rows=B, padded_rows=b_pad)
    y2, s2, ss2 = pl.pallas_call(
        layer2,
        grid=(nb,),
        in_specs=[row_spec(hidden), vec_spec(hidden), vec_spec(hidden),
                  mat_spec(hidden, hidden)],
        out_specs=(row_spec(hidden), vec_spec(hidden), vec_spec(hidden)),
        out_shape=(jax.ShapeDtypeStruct((b_pad, hidden), f32),
                   jax.ShapeDtypeStruct((1, hidden), f32),
                   jax.ShapeDtypeStruct((1, hidden), f32)),
        compiler_params=pltpu.CompilerParams(
            dimension_semantics=("arbitrary",)),
        cost_estimate=pl.CostEstimate(
            flops=2 * b_pad * hidden * hidden,
            transcendentals=0,
            bytes_accessed=(b_pad * hidden * 8 + hidden * hidden * 2)),
    )(y1, scale1, shift1, params["w2"])

    scale2, shift2 = _fold(s2, ss2, params["g2"], params["be2"])

    # ---- Layer 3: relu(bn(y2)) @ W3 + b3 (no reduction -> parallel axis) ----
    out = pl.pallas_call(
        _bn_relu_linear_out_kernel,
        grid=(nb,),
        in_specs=[row_spec(hidden), vec_spec(hidden), vec_spec(hidden),
                  mat_spec(hidden, k_out), vec_spec(k_out)],
        out_specs=row_spec(k_out),
        out_shape=jax.ShapeDtypeStruct((b_pad, k_out), f32),
        compiler_params=pltpu.CompilerParams(
            dimension_semantics=("parallel",)),
        cost_estimate=pl.CostEstimate(
            flops=2 * b_pad * hidden * k_out,
            transcendentals=0,
            bytes_accessed=(b_pad * hidden * 4 + hidden * k_out * 2
                            + b_pad * k_out * 4)),
    )(y2, scale2, shift2, params["w3"], params["b3"])

    # Slice away batch / feature padding and reshape to the module's view().
    out = out[:B, :out_dim]
    return out.reshape((B,) + tuple(output_shape))


# --------------------------------------------------------------------------
# Parameters
# --------------------------------------------------------------------------

def init_generator_params(key, latent_dim, cond_dim, output_shape,
                          hidden=HIDDEN):
    """PyTorch-like uniform fan-in init.

    Linear weights stored transposed (in, out), lane-padded to 128 and cast to
    bf16 (MXU input dtype).  BN gamma=1, beta=0.  b1/b2 are kept only for the
    reference (they cancel under batch-stat BatchNorm)."""
    in_dim = latent_dim + cond_dim
    out_dim = math.prod(output_shape)
    k_in = _round_up(in_dim, 128)
    k_out = _round_up(out_dim, 128)

    ks = jax.random.split(key, 6)

    def lin(kw, kb, fan_in, fan_out):
        bound = 1.0 / math.sqrt(fan_in)
        w = jax.random.uniform(kw, (fan_in, fan_out), jnp.float32, -bound, bound)
        b = jax.random.uniform(kb, (1, fan_out), jnp.float32, -bound, bound)
        return w, b

    w1, b1 = lin(ks[0], ks[1], in_dim, hidden)
    w2, b2 = lin(ks[2], ks[3], hidden, hidden)
    w3, b3 = lin(ks[4], ks[5], hidden, out_dim)

    w1p = jnp.zeros((k_in, hidden), jnp.float32).at[:in_dim].set(w1)
    w3p = jnp.zeros((hidden, k_out), jnp.float32).at[:, :out_dim].set(w3)
    b3p = jnp.zeros((1, k_out), jnp.float32).at[:, :out_dim].set(b3)

    return dict(
        w1=w1p.astype(jnp.bfloat16), b1=b1,
        g1=jnp.ones((1, hidden), jnp.float32),
        be1=jnp.zeros((1, hidden), jnp.float32),
        w2=w2.astype(jnp.bfloat16), b2=b2,
        g2=jnp.ones((1, hidden), jnp.float32),
        be2=jnp.zeros((1, hidden), jnp.float32),
        w3=w3p.astype(jnp.bfloat16), b3=b3p,
    )


# --------------------------------------------------------------------------
# Pure-JAX f32 reference (PyTorch semantics incl. b1/b2, un-padded weights)
# --------------------------------------------------------------------------

def _reference_forward(noise, condition, params, output_shape):
    B = noise.shape[0]
    in_dim = noise.shape[1] + condition.shape[1]
    out_dim = math.prod(output_shape)

    w1 = params["w1"].astype(jnp.float32)[:in_dim]
    w2 = params["w2"].astype(jnp.float32)
    w3 = params["w3"].astype(jnp.float32)[:, :out_dim]
    b3 = params["b3"][:, :out_dim]

    x = jnp.concatenate([noise, condition], axis=1)

    def bn_relu(h, g, be):
        mu = jnp.mean(h, axis=0, keepdims=True)
        var = jnp.mean((h - mu) ** 2, axis=0, keepdims=True)
        return jnp.maximum((h - mu) * jax.lax.rsqrt(var + EPS) * g + be, 0.0)

    h = bn_relu(x @ w1 + params["b1"], params["g1"], params["be1"])
    h = bn_relu(h @ w2 + params["b2"], params["g2"], params["be2"])
    out = h @ w3 + b3
    return out.reshape((B,) + tuple(output_shape))


if __name__ == "__main__":
    latent_dim = 16
    cond_dim = 8
    output_shape = (1, 8, 8)     # prod = 64 -> padded to 128 lanes
    batch = 72                   # deliberately NOT a multiple of the tile

    key = jax.random.PRNGKey(0)
    k_noise, k_cond, k_params = jax.random.split(key, 3)

    noise = jax.random.normal(k_noise, (batch, latent_dim), jnp.float32)
    condition = jax.random.normal(k_cond, (batch, cond_dim), jnp.float32)
    params = init_generator_params(k_params, latent_dim, cond_dim, output_shape)

    # Small batch tile so the demo exercises multi-tile stats accumulation and
    # the padded-row masking path (72 rows -> 3 tiles of 32, 24 pad rows).
    out = generator_forward(noise, condition, params, output_shape,
                            block_batch=32)
    out = jax.block_until_ready(out)

    ref = _reference_forward(noise, condition, params, output_shape)
    assert out.shape == (batch,) + output_shape
    assert jnp.allclose(out, ref, atol=5e-2, rtol=5e-2), \
        float(jnp.max(jnp.abs(out - ref)))

    print("KERNEL_OK")
</pallas_src>

<mosaic_0001>
module attributes {stable_mosaic.version = 11 : i64} {
  func.func @_bn_relu_linear_out_kernel(%arg0: i32, %arg1: memref<32x512xf32, #tpu.memory_space<vmem>>, %arg2: memref<1x512xf32, #tpu.memory_space<vmem>>, %arg3: memref<1x512xf32, #tpu.memory_space<vmem>>, %arg4: memref<512x128xbf16, #tpu.memory_space<vmem>>, %arg5: memref<1x128xf32, #tpu.memory_space<vmem>>, %arg6: memref<32x128xf32, #tpu.memory_space<vmem>>) attributes {dimension_semantics = [#tpu.dimension_semantics<parallel>], iteration_bounds = array<i64: 3>, scalar_prefetch = 0 : i64, scratch_operands = 0 : i64, tpu.core_type = #tpu.core_type<tc>, window_params = [{transform_indices = @transform_0, window_bounds = array<i64: 32, 512>}, {pipeline_mode = #tpu.pipeline_mode<synchronous>, transform_indices = @transform_1, window_bounds = array<i64: 1, 512>}, {pipeline_mode = #tpu.pipeline_mode<synchronous>, transform_indices = @transform_2, window_bounds = array<i64: 1, 512>}, {pipeline_mode = #tpu.pipeline_mode<synchronous>, transform_indices = @transform_3, window_bounds = array<i64: 512, 128>}, {pipeline_mode = #tpu.pipeline_mode<synchronous>, transform_indices = @transform_4, window_bounds = array<i64: 1, 128>}, {transform_indices = @transform_5, window_bounds = array<i64: 32, 128>}]} {
    %c0 = arith.constant 0 : index
    %c0_0 = arith.constant 0 : index
    %0 = vector.load %arg1[%c0, %c0_0] : memref<32x512xf32, #tpu.memory_space<vmem>>, vector<32x512xf32>
    %c0_1 = arith.constant 0 : index
    %c0_2 = arith.constant 0 : index
    %1 = vector.load %arg2[%c0_1, %c0_2] : memref<1x512xf32, #tpu.memory_space<vmem>>, vector<1x512xf32>
    %2 = vector.broadcast %1 : vector<1x512xf32> to vector<32x512xf32>
    %3 = arith.mulf %0, %2 : vector<32x512xf32>
    %c0_3 = arith.constant 0 : index
    %c0_4 = arith.constant 0 : index
    %4 = vector.load %arg3[%c0_3, %c0_4] : memref<1x512xf32, #tpu.memory_space<vmem>>, vector<1x512xf32>
    %5 = vector.broadcast %4 : vector<1x512xf32> to vector<32x512xf32>
    %6 = arith.addf %3, %5 : vector<32x512xf32>
    %cst = arith.constant 0.000000e+00 : f32
    %7 = vector.broadcast %cst : f32 to vector<32x512xf32>
    %8 = arith.maximumf %6, %7 : vector<32x512xf32>
    %9 = arith.truncf %8 : vector<32x512xf32> to vector<32x512xbf16>
    %c0_5 = arith.constant 0 : index
    %c0_6 = arith.constant 0 : index
    %10 = vector.load %arg4[%c0_5, %c0_6] : memref<512x128xbf16, #tpu.memory_space<vmem>>, vector<512x128xbf16>
    %cst_7 = arith.constant dense<0.000000e+00> : vector<32x128xf32>
    %11 = tpu.matmul %9, %10, %cst_7 {dimension_numbers = #tpu.dot_dimension_numbers<[1], [0], [0], [1], [0, 0, 1, 1], [], []>} : vector<32x512xbf16>, vector<512x128xbf16>, vector<32x128xf32> -> vector<32x128xf32>
    %c0_8 = arith.constant 0 : index
    %c0_9 = arith.constant 0 : index
    %12 = vector.load %arg5[%c0_8, %c0_9] : memref<1x128xf32, #tpu.memory_space<vmem>>, vector<1x128xf32>
    %13 = vector.broadcast %12 : vector<1x128xf32> to vector<32x128xf32>
    %14 = arith.addf %11, %13 : vector<32x128xf32>
    %c0_10 = arith.constant 0 : index
    %c0_11 = arith.constant 0 : index
    %15 = vector.load %arg6[%c0_10, %c0_11] : memref<32x128xf32, #tpu.memory_space<vmem>>, vector<32x128xf32>
    tpu.vector_store %arg6[%c0_10, %c0_11], %14 {strides = array<i32>} : memref<32x128xf32, #tpu.memory_space<vmem>>, vector<32x128xf32>,
    return
  }
  func.func @transform_0(%arg0: i32) -> (i32, i32) {
    %c0_i32 = arith.constant 0 : i32
    %c0_i32_0 = arith.constant 0 : i32
    return %arg0, %c0_i32 : i32, i32
  }
  func.func @transform_1(%arg0: i32) -> (i32, i32) {
    %c0_i32 = arith.constant 0 : i32
    %c0_i32_0 = arith.constant 0 : i32
    %c0_i32_1 = arith.constant 0 : i32
    return %c0_i32, %c0_i32_0 : i32, i32
  }
  func.func @transform_2(%arg0: i32) -> (i32, i32) {
    %c0_i32 = arith.constant 0 : i32
    %c0_i32_0 = arith.constant 0 : i32
    %c0_i32_1 = arith.constant 0 : i32
    return %c0_i32, %c0_i32_0 : i32, i32
  }
  func.func @transform_3(%arg0: i32) -> (i32, i32) {
    %c0_i32 = arith.constant 0 : i32
    %c0_i32_0 = arith.constant 0 : i32
    %c0_i32_1 = arith.constant 0 : i32
    return %c0_i32, %c0_i32_0 : i32, i32
  }
  func.func @transform_4(%arg0: i32) -> (i32, i32) {
    %c0_i32 = arith.constant 0 : i32
    %c0_i32_0 = arith.constant 0 : i32
    %c0_i32_1 = arith.constant 0 : i32
    return %c0_i32, %c0_i32_0 : i32, i32
  }
  func.func @transform_5(%arg0: i32) -> (i32, i32) {
    %c0_i32 = arith.constant 0 : i32
    %c0_i32_0 = arith.constant 0 : i32
    return %arg0, %c0_i32 : i32, i32
  }
}

module attributes {stable_mosaic.version = 11 : i64} {
  func.func @_bn_relu_linear_stats_kernel(%arg0: i32, %arg1: memref<32x512xf32, #tpu.memory_space<vmem>>, %arg2: memref<1x512xf32, #tpu.memory_space<vmem>>, %arg3: memref<1x512xf32, #tpu.memory_space<vmem>>, %arg4: memref<512x512xbf16, #tpu.memory_space<vmem>>, %arg5: memref<32x512xf32, #tpu.memory_space<vmem>>, %arg6: memref<1x512xf32, #tpu.memory_space<vmem>>, %arg7: memref<1x512xf32, #tpu.memory_space<vmem>>) attributes {dimension_semantics = [#tpu.dimension_semantics<arbitrary>], iteration_bounds = array<i64: 3>, scalar_prefetch = 0 : i64, scratch_operands = 0 : i64, tpu.core_type = #tpu.core_type<tc>, window_params = [{transform_indices = @transform_0, window_bounds = array<i64: 32, 512>}, {pipeline_mode = #tpu.pipeline_mode<synchronous>, transform_indices = @transform_1, window_bounds = array<i64: 1, 512>}, {pipeline_mode = #tpu.pipeline_mode<synchronous>, transform_indices = @transform_2, window_bounds = array<i64: 1, 512>}, {pipeline_mode = #tpu.pipeline_mode<synchronous>, transform_indices = @transform_3, window_bounds = array<i64: 512, 512>}, {transform_indices = @transform_4, window_bounds = array<i64: 32, 512>}, {pipeline_mode = #tpu.pipeline_mode<synchronous>, transform_indices = @transform_5, window_bounds = array<i64: 1, 512>}, {pipeline_mode = #tpu.pipeline_mode<synchronous>, transform_indices = @transform_6, window_bounds = array<i64: 1, 512>}]} {
    %c0 = arith.constant 0 : index
    %c0_0 = arith.constant 0 : index
    %0 = vector.load %arg1[%c0, %c0_0] : memref<32x512xf32, #tpu.memory_space<vmem>>, vector<32x512xf32>
    %c0_1 = arith.constant 0 : index
    %c0_2 = arith.constant 0 : index
    %1 = vector.load %arg2[%c0_1, %c0_2] : memref<1x512xf32, #tpu.memory_space<vmem>>, vector<1x512xf32>
    %2 = vector.broadcast %1 : vector<1x512xf32> to vector<32x512xf32>
    %3 = arith.mulf %0, %2 : vector<32x512xf32>
    %c0_3 = arith.constant 0 : index
    %c0_4 = arith.constant 0 : index
    %4 = vector.load %arg3[%c0_3, %c0_4] : memref<1x512xf32, #tpu.memory_space<vmem>>, vector<1x512xf32>
    %5 = vector.broadcast %4 : vector<1x512xf32> to vector<32x512xf32>
    %6 = arith.addf %3, %5 : vector<32x512xf32>
    %cst = arith.constant 0.000000e+00 : f32
    %7 = vector.broadcast %cst : f32 to vector<32x512xf32>
    %8 = arith.maximumf %6, %7 : vector<32x512xf32>
    %c32_i32 = arith.constant 32 : i32
    %9 = arith.muli %arg0, %c32_i32 : i32
    %10 = tpu.iota {dimensions = array<i32: 0>} : vector<32x512xi32>
    %11 = vector.broadcast %9 : i32 to vector<32x512xi32>
    %12 = arith.addi %11, %10 : vector<32x512xi32>
    %c72_i32 = arith.constant 72 : i32
    %13 = vector.broadcast %c72_i32 : i32 to vector<32x512xi32>
    %14 = arith.cmpi slt, %12, %13 : vector<32x512xi32>
    %cst_5 = arith.constant 0.000000e+00 : f32
    %15 = vector.broadcast %cst_5 : f32 to vector<32x512xf32>
    %16 = arith.select %14, %8, %15 : vector<32x512xi1>, vector<32x512xf32>
    %17 = arith.truncf %16 : vector<32x512xf32> to vector<32x512xbf16>
    %c0_6 = arith.constant 0 : index
    %c0_7 = arith.constant 0 : index
    %18 = vector.load %arg4[%c0_6, %c0_7] : memref<512x512xbf16, #tpu.memory_space<vmem>>, vector<512x512xbf16>
    %cst_8 = arith.constant dense<0.000000e+00> : vector<32x512xf32>
    %19 = tpu.matmul %17, %18, %cst_8 {dimension_numbers = #tpu.dot_dimension_numbers<[1], [0], [0], [1], [0, 0, 1, 1], [], []>} : vector<32x512xbf16>, vector<512x512xbf16>, vector<32x512xf32> -> vector<32x512xf32>
    %c0_9 = arith.constant 0 : index
    %c0_10 = arith.constant 0 : index
    %20 = vector.load %arg5[%c0_9, %c0_10] : memref<32x512xf32, #tpu.memory_space<vmem>>, vector<32x512xf32>
    tpu.vector_store %arg5[%c0_9, %c0_10], %19 {strides = array<i32>} : memref<32x512xf32, #tpu.memory_space<vmem>>, vector<32x512xf32>,
    %c0_i32 = arith.constant 0 : i32
    %21 = arith.cmpi eq, %arg0, %c0_i32 : i32
    %22 = arith.extui %21 : i1 to i32
    %c0_i32_11 = arith.constant 0 : i32
    %23 = arith.cmpi ne, %22, %c0_i32_11 : i32
    scf.if %23 {
      %cst_22 = arith.constant 0.000000e+00 : f32
      %35 = vector.broadcast %cst_22 : f32 to vector<1x512xf32>
      %c0_23 = arith.constant 0 : index
      %c0_24 = arith.constant 0 : index
      %36 = vector.load %arg6[%c0_23, %c0_24] : memref<1x512xf32, #tpu.memory_space<vmem>>, vector<1x512xf32>
      tpu.vector_store %arg6[%c0_23, %c0_24], %35 {strides = array<i32>} : memref<1x512xf32, #tpu.memory_space<vmem>>, vector<1x512xf32>,
      %cst_25 = arith.constant 0.000000e+00 : f32
      %37 = vector.broadcast %cst_25 : f32 to vector<1x512xf32>
      %c0_26 = arith.constant 0 : index
      %c0_27 = arith.constant 0 : index
      %38 = vector.load %arg7[%c0_26, %c0_27] : memref<1x512xf32, #tpu.memory_space<vmem>>, vector<1x512xf32>
      tpu.vector_store %arg7[%c0_26, %c0_27], %37 {strides = array<i32>} : memref<1x512xf32, #tpu.memory_space<vmem>>, vector<1x512xf32>,
    } else {
    }
    %c0_12 = arith.constant 0 : index
    %c0_13 = arith.constant 0 : index
    %24 = vector.load %arg6[%c0_12, %c0_13] : memref<1x512xf32, #tpu.memory_space<vmem>>, vector<1x512xf32>
    %cst_14 = arith.constant dense<0.000000e+00> : vector<512xf32>
    %25 = vector.multi_reduction <add>, %19, %cst_14 [0] : vector<32x512xf32> to vector<512xf32>
    %26 = vector.shape_cast %25 : vector<512xf32> to vector<1x512xf32>
    %27 = arith.addf %24, %26 : vector<1x512xf32>
    %c0_15 = arith.constant 0 : index
    %c0_16 = arith.constant 0 : index
    %28 = vector.load %arg6[%c0_15, %c0_16] : memref<1x512xf32, #tpu.memory_space<vmem>>, vector<1x512xf32>
    tpu.vector_store %arg6[%c0_15, %c0_16], %27 {strides = array<i32>} : memref<1x512xf32, #tpu.memory_space<vmem>>, vector<1x512xf32>,
    %c0_17 = arith.constant 0 : index
    %c0_18 = arith.constant 0 : index
    %29 = vector.load %arg7[%c0_17, %c0_18] : memref<1x512xf32, #tpu.memory_space<vmem>>, vector<1x512xf32>
    %30 = arith.mulf %19, %19 : vector<32x512xf32>
    %cst_19 = arith.constant dense<0.000000e+00> : vector<512xf32>
    %31 = vector.multi_reduction <add>, %30, %cst_19 [0] : vector<32x512xf32> to vector<512xf32>
    %32 = vector.shape_cast %31 : vector<512xf32> to vector<1x512xf32>
    %33 = arith.addf %29, %32 : vector<1x512xf32>
    %c0_20 = arith.constant 0 : index
    %c0_21 = arith.constant 0 : index
    %34 = vector.load %arg7[%c0_20, %c0_21] : memref<1x512xf32, #tpu.memory_space<vmem>>, vector<1x512xf32>
    tpu.vector_store %arg7[%c0_20, %c0_21], %33 {strides = array<i32>} : memref<1x512xf32, #tpu.memory_space<vmem>>, vector<1x512xf32>,
    return
  }
  func.func @transform_0(%arg0: i32) -> (i32, i32) {
    %c0_i32 = arith.constant 0 : i32
    %c0_i32_0 = arith.constant 0 : i32
    return %arg0, %c0_i32 : i32, i32
  }
  func.func @transform_1(%arg0: i32) -> (i32, i32) {
    %c0_i32 = arith.constant 0 : i32
    %c0_i32_0 = arith.constant 0 : i32
    %c0_i32_1 = arith.constant 0 : i32
    return %c0_i32, %c0_i32_0 : i32, i32
  }
  func.func @transform_2(%arg0: i32) -> (i32, i32) {
    %c0_i32 = arith.constant 0 : i32
    %c0_i32_0 = arith.constant 0 : i32
    %c0_i32_1 = arith.constant 0 : i32
    return %c0_i32, %c0_i32_0 : i32, i32
  }
  func.func @transform_3(%arg0: i32) -> (i32, i32) {
    %c0_i32 = arith.constant 0 : i32
    %c0_i32_0 = arith.constant 0 : i32
    %c0_i32_1 = arith.constant 0 : i32
    return %c0_i32, %c0_i32_0 : i32, i32
  }
  func.func @transform_4(%arg0: i32) -> (i32, i32) {
    %c0_i32 = arith.constant 0 : i32
    %c0_i32_0 = arith.constant 0 : i32
    return %arg0, %c0_i32 : i32, i32
  }
  func.func @transform_5(%arg0: i32) -> (i32, i32) {
    %c0_i32 = arith.constant 0 : i32
    %c0_i32_0 = arith.constant 0 : i32
    %c0_i32_1 = arith.constant 0 : i32
    return %c0_i32, %c0_i32_0 : i32, i32
  }
  func.func @transform_6(%arg0: i32) -> (i32, i32) {
    %c0_i32 = arith.constant 0 : i32
    %c0_i32_0 = arith.constant 0 : i32
    %c0_i32_1 = arith.constant 0 : i32
    return %c0_i32, %c0_i32_0 : i32, i32
  }
}

module attributes {stable_mosaic.version = 11 : i64} {
  func.func @_linear_stats_kernel(%arg0: i32, %arg1: memref<32x128xbf16, #tpu.memory_space<vmem>>, %arg2: memref<128x512xbf16, #tpu.memory_space<vmem>>, %arg3: memref<32x512xf32, #tpu.memory_space<vmem>>, %arg4: memref<1x512xf32, #tpu.memory_space<vmem>>, %arg5: memref<1x512xf32, #tpu.memory_space<vmem>>) attributes {dimension_semantics = [#tpu.dimension_semantics<arbitrary>], iteration_bounds = array<i64: 3>, scalar_prefetch = 0 : i64, scratch_operands = 0 : i64, tpu.core_type = #tpu.core_type<tc>, window_params = [{transform_indices = @transform_0, window_bounds = array<i64: 32, 128>}, {pipeline_mode = #tpu.pipeline_mode<synchronous>, transform_indices = @transform_1, window_bounds = array<i64: 128, 512>}, {transform_indices = @transform_2, window_bounds = array<i64: 32, 512>}, {pipeline_mode = #tpu.pipeline_mode<synchronous>, transform_indices = @transform_3, window_bounds = array<i64: 1, 512>}, {pipeline_mode = #tpu.pipeline_mode<synchronous>, transform_indices = @transform_4, window_bounds = array<i64: 1, 512>}]} {
    %c0 = arith.constant 0 : index
    %c0_0 = arith.constant 0 : index
    %0 = vector.load %arg1[%c0, %c0_0] : memref<32x128xbf16, #tpu.memory_space<vmem>>, vector<32x128xbf16>
    %c0_1 = arith.constant 0 : index
    %c0_2 = arith.constant 0 : index
    %1 = vector.load %arg2[%c0_1, %c0_2] : memref<128x512xbf16, #tpu.memory_space<vmem>>, vector<128x512xbf16>
    %cst = arith.constant dense<0.000000e+00> : vector<32x512xf32>
    %2 = tpu.matmul %0, %1, %cst {dimension_numbers = #tpu.dot_dimension_numbers<[1], [0], [0], [1], [0, 0, 1, 1], [], []>} : vector<32x128xbf16>, vector<128x512xbf16>, vector<32x512xf32> -> vector<32x512xf32>
    %c0_3 = arith.constant 0 : index
    %c0_4 = arith.constant 0 : index
    %3 = vector.load %arg3[%c0_3, %c0_4] : memref<32x512xf32, #tpu.memory_space<vmem>>, vector<32x512xf32>
    tpu.vector_store %arg3[%c0_3, %c0_4], %2 {strides = array<i32>} : memref<32x512xf32, #tpu.memory_space<vmem>>, vector<32x512xf32>,
    %c0_i32 = arith.constant 0 : i32
    %4 = arith.cmpi eq, %arg0, %c0_i32 : i32
    %5 = arith.extui %4 : i1 to i32
    %c0_i32_5 = arith.constant 0 : i32
    %6 = arith.cmpi ne, %5, %c0_i32_5 : i32
    scf.if %6 {
      %cst_16 = arith.constant 0.000000e+00 : f32
      %18 = vector.broadcast %cst_16 : f32 to vector<1x512xf32>
      %c0_17 = arith.constant 0 : index
      %c0_18 = arith.constant 0 : index
      %19 = vector.load %arg4[%c0_17, %c0_18] : memref<1x512xf32, #tpu.memory_space<vmem>>, vector<1x512xf32>
      tpu.vector_store %arg4[%c0_17, %c0_18], %18 {strides = array<i32>} : memref<1x512xf32, #tpu.memory_space<vmem>>, vector<1x512xf32>,
      %cst_19 = arith.constant 0.000000e+00 : f32
      %20 = vector.broadcast %cst_19 : f32 to vector<1x512xf32>
      %c0_20 = arith.constant 0 : index
      %c0_21 = arith.constant 0 : index
      %21 = vector.load %arg5[%c0_20, %c0_21] : memref<1x512xf32, #tpu.memory_space<vmem>>, vector<1x512xf32>
      tpu.vector_store %arg5[%c0_20, %c0_21], %20 {strides = array<i32>} : memref<1x512xf32, #tpu.memory_space<vmem>>, vector<1x512xf32>,
    } else {
    }
    %c0_6 = arith.constant 0 : index
    %c0_7 = arith.constant 0 : index
    %7 = vector.load %arg4[%c0_6, %c0_7] : memref<1x512xf32, #tpu.memory_space<vmem>>, vector<1x512xf32>
    %cst_8 = arith.constant dense<0.000000e+00> : vector<512xf32>
    %8 = vector.multi_reduction <add>, %2, %cst_8 [0] : vector<32x512xf32> to vector<512xf32>
    %9 = vector.shape_cast %8 : vector<512xf32> to vector<1x512xf32>
    %10 = arith.addf %7, %9 : vector<1x512xf32>
    %c0_9 = arith.constant 0 : index
    %c0_10 = arith.constant 0 : index
    %11 = vector.load %arg4[%c0_9, %c0_10] : memref<1x512xf32, #tpu.memory_space<vmem>>, vector<1x512xf32>
    tpu.vector_store %arg4[%c0_9, %c0_10], %10 {strides = array<i32>} : memref<1x512xf32, #tpu.memory_space<vmem>>, vector<1x512xf32>,
    %c0_11 = arith.constant 0 : index
    %c0_12 = arith.constant 0 : index
    %12 = vector.load %arg5[%c0_11, %c0_12] : memref<1x512xf32, #tpu.memory_space<vmem>>, vector<1x512xf32>
    %13 = arith.mulf %2, %2 : vector<32x512xf32>
    %cst_13 = arith.constant dense<0.000000e+00> : vector<512xf32>
    %14 = vector.multi_reduction <add>, %13, %cst_13 [0] : vector<32x512xf32> to vector<512xf32>
    %15 = vector.shape_cast %14 : vector<512xf32> to vector<1x512xf32>
    %16 = arith.addf %12, %15 : vector<1x512xf32>
    %c0_14 = arith.constant 0 : index
    %c0_15 = arith.constant 0 : index
    %17 = vector.load %arg5[%c0_14, %c0_15] : memref<1x512xf32, #tpu.memory_space<vmem>>, vector<1x512xf32>
    tpu.vector_store %arg5[%c0_14, %c0_15], %16 {strides = array<i32>} : memref<1x512xf32, #tpu.memory_space<vmem>>, vector<1x512xf32>,
    return
  }
  func.func @transform_0(%arg0: i32) -> (i32, i32) {
    %c0_i32 = arith.constant 0 : i32
    %c0_i32_0 = arith.constant 0 : i32
    return %arg0, %c0_i32 : i32, i32
  }
  func.func @transform_1(%arg0: i32) -> (i32, i32) {
    %c0_i32 = arith.constant 0 : i32
    %c0_i32_0 = arith.constant 0 : i32
    %c0_i32_1 = arith.constant 0 : i32
    return %c0_i32, %c0_i32_0 : i32, i32
  }
  func.func @transform_2(%arg0: i32) -> (i32, i32) {
    %c0_i32 = arith.constant 0 : i32
    %c0_i32_0 = arith.constant 0 : i32
    return %arg0, %c0_i32 : i32, i32
  }
  func.func @transform_3(%arg0: i32) -> (i32, i32) {
    %c0_i32 = arith.constant 0 : i32
    %c0_i32_0 = arith.constant 0 : i32
    %c0_i32_1 = arith.constant 0 : i32
    return %c0_i32, %c0_i32_0 : i32, i32
  }
  func.func @transform_4(%arg0: i32) -> (i32, i32) {
    %c0_i32 = arith.constant 0 : i32
    %c0_i32_0 = arith.constant 0 : i32
    %c0_i32_1 = arith.constant 0 : i32
    return %c0_i32, %c0_i32_0 : i32, i32
  }
}

</mosaic_0001>

<llo_original>
// kernel: generator_forward.3
$region0: #{generator_forward.3}
  #allocation0 [shape = 'u32[]', space=smem, size = 0x4, offset = 0x4, fixed_abs, tag = 'smem constant byte address 0x4 - core index']
  #allocation1 [shape = 'u32[144,128]{1,0:T(1,128)}', space=vmem, size = 0x12000, scoped, tag = 'internal scratch']
  %s0 = inlined_call_operand.vmem [shape: bf16[96,128], index: 0, kind: input, shape index: {}]
  %s1 = inlined_call_operand.hbm [shape: bf16[128,512], index: 1, kind: input, shape index: {}]
  %s2 = inlined_call_operand.vmem [shape: f32[96,512], index: 2, kind: output, shape index: {0}]
  %s3 = inlined_call_operand.vmem [shape: f32[1,512], index: 3, kind: output, shape index: {1}]
  %s4 = inlined_call_operand.vmem [shape: f32[1,512], index: 4, kind: output, shape index: {2}]
  %5 = xla_tuple %s2, %s3, %s4
  %s6 = sld [smem:[#allocation0]]
  $region65: #{generator_forward.3} parent=0
    _
  %s8 = ssub.s32 1, %s6
  %s9 = scalar_select 0, %s8, %s6
  $region1: #{generator_forward.3} parent=0
    #allocation2 [shape = 'u8[131072]{0}', space=vmem, size = 0x20000, scoped, tag = 'input window, operand 1, single buffered']
    #allocation3 [shape = 's32[2]{0}', space=sflag, size = 0x8, scoped, tag = 'scoped memory for generator_forward.3']
    %10 = vsyncpa [#allocation3], 0
    loop: start=0, step=1, limit=5
    $region2: #{generator_forward.3} parent=1 // loop_pre_header
      _
    $region3: #{generator_forward.3} parent=1 // loop_header
      %s12 = sphi 0, %s16
      %p13 = scmp.ge.s32.totalorder %s12, 5
      %s22 = sphi 0, %s24
      %s25 = sphi 0, %s22
      %s26 = sphi 0, %s25
      %s42 = sphi 0, %s26
      %s46 = sphi 0, %s46
      %s48 = sphi 0, %s46
      %s49 = sphi 0, %s48
      %s63 = sphi 0, %s49
      %s69 = sphi 0, %s71
      %s72 = sphi 0, %s69
      %s73 = sphi 0, %s72
      %s89 = sphi 0, %s73
      %s93 = sphi 0, %s93
      %s95 = sphi 0, %s93
      %s96 = sphi 0, %s95
      %s110 = sphi 0, %s96
      %s114 = sphi 0, %s114
      %s116 = sphi 0, %s114
      %s117 = sphi 0, %s116
      %s131 = sphi 0, %s117
    $region4: #{generator_forward.3} parent=1 // loop_header_branch
      %15 = sbr.rel (%p13) target = $region8
    $region5: #{generator_forward.3} parent=1 // loop_body
      %s17 = ssub.s32 %s12, 1
      %s18 = ssub.s32 %s12, 2
      %s19 = sadd.s32 %s12, 1
      %s20 = ssub.s32 %s12, %s19
      %p21 = scmp.eq.s32.totalorder %s20, 0
      %s23 = sadd.s32 %s22, 1
      %s24 = scalar_select %p21, %s22, %s23
      %p27 = pneg %p21
      %p28 = scmp.eq.s32.totalorder %s12, 2
      %p29 = por %p27, %p28
      %p30 = scmp.ne.s32.totalorder %s22, %s25
      %p31 = scmp.eq.s32.totalorder %s12, 0
      %p32 = por %p30, %p31
      %p33 = scmp.ne.s32.totalorder %s22, %s25
      %p34 = scmp.eq.s32.totalorder %s17, 2
      %p35 = por %p33, %p34
      %p36 = scmp.ne.s32.totalorder %s25, %s26
      %p37 = scmp.eq.s32.totalorder %s17, 0
      %p38 = por %p36, %p37
      %p39 = scmp.ne.s32.totalorder %s25, %s26
      %p40 = scmp.eq.s32.totalorder %s18, 2
      %p41 = por %p39, %p40
      %p43 = scmp.ne.s32.totalorder %s26, %s42
      %p44 = scmp.eq.s32.totalorder %s18, 0
      %p45 = por %p43, %p44
      %s47 = sadd.s32 %s46, 1
      %p50 = scmp.eq.s32.totalorder %s12, 2
      %p51 = scmp.ne.s32.totalorder %s46, %s48
      %p52 = scmp.eq.s32.totalorder %s12, 0
      %p53 = por %p51, %p52
      %p54 = scmp.ne.s32.totalorder %s46, %s48
      %p55 = scmp.eq.s32.totalorder %s17, 2
      %p56 = por %p54, %p55
      %p57 = scmp.ne.s32.totalorder %s48, %s49
      %p58 = scmp.eq.s32.totalorder %s17, 0
      %p59 = por %p57, %p58
      %p60 = scmp.ne.s32.totalorder %s48, %s49
      %p61 = scmp.eq.s32.totalorder %s18, 2
      %p62 = por %p60, %p61
      %p64 = scmp.ne.s32.totalorder %s49, %s63
      %p65 = scmp.eq.s32.totalorder %s18, 0
      %p66 = por %p64, %p65
      %s67 = ssub.s32 %s12, %s19
      %p68 = scmp.eq.s32.totalorder %s67, 0
      %s70 = sadd.s32 %s69, 1
      %s71 = scalar_select %p68, %s69, %s70
      %p74 = pneg %p68
      %p75 = scmp.eq.s32.totalorder %s12, 2
      %p76 = por %p74, %p75
      %p77 = scmp.ne.s32.totalorder %s69, %s72
      %p78 = scmp.eq.s32.totalorder %s12, 0
      %p79 = por %p77, %p78
      %p80 = scmp.ne.s32.totalorder %s69, %s72
      %p81 = scmp.eq.s32.totalorder %s17, 2
      %p82 = por %p80, %p81
      %p83 = scmp.ne.s32.totalorder %s72, %s73
      %p84 = scmp.eq.s32.totalorder %s17, 0
      %p85 = por %p83, %p84
      %p86 = scmp.ne.s32.totalorder %s72, %s73
      %p87 = scmp.eq.s32.totalorder %s18, 2
      %p88 = por %p86, %p87
      %p90 = scmp.ne.s32.totalorder %s73, %s89
      %p91 = scmp.eq.s32.totalorder %s18, 0
      %p92 = por %p90, %p91
      %s94 = sadd.s32 %s93, 1
      %p97 = scmp.eq.s32.totalorder %s12, 2
      %p98 = scmp.ne.s32.totalorder %s93, %s95
      %p99 = scmp.eq.s32.totalorder %s12, 0
      %p100 = por %p98, %p99
      %p101 = scmp.ne.s32.totalorder %s93, %s95
      %p102 = scmp.eq.s32.totalorder %s17, 2
      %p103 = por %p101, %p102
      %p104 = scmp.ne.s32.totalorder %s95, %s96
      %p105 = scmp.eq.s32.totalorder %s17, 0
      %p106 = por %p104, %p105
      %p107 = scmp.ne.s32.totalorder %s95, %s96
      %p108 = scmp.eq.s32.totalorder %s18, 2
      %p109 = por %p107, %p108
      %p111 = scmp.ne.s32.totalorder %s96, %s110
      %p112 = scmp.eq.s32.totalorder %s18, 0
      %p113 = por %p111, %p112
      %s115 = sadd.s32 %s114, 1
      %p118 = scmp.eq.s32.totalorder %s12, 2
      %p119 = scmp.ne.s32.totalorder %s114, %s116
      %p120 = scmp.eq.s32.totalorder %s12, 0
      %p121 = por %p119, %p120
      %p122 = scmp.ne.s32.totalorder %s114, %s116
      %p123 = scmp.eq.s32.totalorder %s17, 2
      %p124 = por %p122, %p123
      %p125 = scmp.ne.s32.totalorder %s116, %s117
      %p126 = scmp.eq.s32.totalorder %s17, 0
      %p127 = por %p125, %p126
      %p128 = scmp.ne.s32.totalorder %s116, %s117
      %p129 = scmp.eq.s32.totalorder %s18, 2
      %p130 = por %p128, %p129
      %p132 = scmp.ne.s32.totalorder %s117, %s131
      %p133 = scmp.eq.s32.totalorder %s18, 0
      %p134 = por %p132, %p133
      %p135 = scmp.le.s32.totalorder 1, %s12
      %p136 = scmp.lt.s32.totalorder %s12, 4
      %p137 = pnand %p135, %p136
      %p138 = pneg %p137
      // Predicated region
      $region9: #{generator_forward.3} parent=5 // pred_check
        _
      $region10: #{generator_forward.3} parent=5 // pred_check_branch
        %140 = sbr.rel (%p137) target = $region12
      $region11: #{generator_forward.3} parent=5 // pred_region
        %s141 = ssub.s32 %s12, 1
        // Predicated region
        $region13: #{generator_forward.3} parent=11 // pred_check
          %p142 = pneg %p59
        $region14: #{generator_forward.3} parent=11 // pred_check_branch
          %144 = sbr.rel (%p142) target = $region16
        $region15: #{generator_forward.3} parent=11 // pred_region
          %s146 = ssub.s32 4096, 4096
          %147 = vsyncadd [#allocation3], %s146
          %s148 = sshll.u32 [#allocation2], 4
          %s149 = int_to_ptr.vmem [resolvable:$true] %s148
          %154 = dma.hbm_to_vmem [thread:$0]  %s1, 4096, %s149, [#allocation3], 256, 256, 16
        $region16: #{generator_forward.3} parent=11 // pred_fallthru
          _
      $region12: #{generator_forward.3} parent=5 // pred_fallthru
        _
      %p155 = scmp.lt.s32.totalorder %s12, 3
      // Predicated region
      $region17: #{generator_forward.3} parent=5 // pred_check
        %p156 = pneg %p155
      $region18: #{generator_forward.3} parent=5 // pred_check_branch
        %158 = sbr.rel (%p156) target = $region20
      $region19: #{generator_forward.3} parent=5 // pred_region
        // Predicated region
        $region21: #{generator_forward.3} parent=19 // pred_check
          %p159 = pneg %p32
        $region22: #{generator_forward.3} parent=19 // pred_check_branch
          %161 = sbr.rel (%p159) target = $region24
        $region23: #{generator_forward.3} parent=19 // pred_region
          %s162 = smul.u32 4, %s12
          %p163 = scmp.lt.s32.totalorder %s162, 11
          %s164 = scalar_select %p163, %s162, 11
          %s165 = smul.addr %s164, 4
          %s166 = scalar_lea.vmem %s0, %s165
          %s167 = smul.u32 4, %s12
        $region24: #{generator_forward.3} parent=19 // pred_fallthru
          _
      $region20: #{generator_forward.3} parent=5 // pred_fallthru
        _
      %p168 = scmp.le.s32.totalorder 1, %s12
      %p169 = scmp.lt.s32.totalorder %s12, 4
      %p170 = pnand %p168, %p169
      %p171 = pneg %p170
      // Predicated region
      $region25: #{generator_forward.3} parent=5 // pred_check
        _
      $region26: #{generator_forward.3} parent=5 // pred_check_branch
        %173 = sbr.rel (%p170) target = $region28
      $region27: #{generator_forward.3} parent=5 // pred_region
        %s174 = ssub.s32 %s12, 1
        // Predicated region
        $region29: #{generator_forward.3} parent=27 // pred_check
          %p175 = pneg %p59
        $region30: #{generator_forward.3} parent=27 // pred_check_branch
          %177 = sbr.rel (%p175) target = $region32
        $region31: #{generator_forward.3} parent=27 // pred_region
          %178 = dma.done [#allocation3], 4096
        $region32: #{generator_forward.3} parent=27 // pred_fallthru
          _
        %s179 = smul.u32 4, %s17
        %p180 = scmp.lt.s32.totalorder %s179, 11
        %s181 = scalar_select %p180, %s179, 11
        %s182 = smul.addr %s181, 4
        %s183 = scalar_lea.vmem %s0, %s182
        %p184 = pneg %p38
        %p185 = pneg %p35
        %p186 = pneg %p59
        %p187 = pneg %p56
        %p188 = pneg %p85
        %p189 = pneg %p82
        %s190 = smul.u32 4, %s17
        %p191 = scmp.lt.s32.totalorder %s190, 11
        %s192 = scalar_select %p191, %s190, 11
        %s193 = smul.addr %s192, 4
        %s194 = smul.addr %s193, 8
        %s195 = scalar_lea.vmem %s2, %s194
        %p196 = pneg %p106
        %p197 = pneg %p103
        %p198 = pneg %p127
        %p199 = pneg %p124
        %s200 = smul.u32 4, %s17
        %p201 = scmp.lt.s32.totalorder %s200, 11
        %s202 = scalar_select %p201, %s200, 11
        %s203 = smul.addr %s202, 4
        %s204 = scalar_lea.vmem %s0, %s203
        %s205 = smul.u32 4, %s17
        %s206 = smul.u32 4, %s17
        %p207 = scmp.lt.s32.totalorder %s206, 11
        %s208 = scalar_select %p207, %s206, 11
        %s209 = smul.addr %s208, 4
        %s210 = smul.addr %s209, 8
        %s211 = scalar_lea.vmem %s2, %s210
        %s212 = smul.u32 4, %s17
        %v214 = vld [vmem:[%s204] sm:$0xf]
        %v215 = vld [vmem:[%s204 + $0x4] sm:$0xf]
        %v216 = vld [vmem:[%s204 + $0x8] sm:$0xf]
        %v217 = vld [vmem:[%s204 + $0xc] sm:$0xf]
        %v218 = vld [vmem:[#allocation2] sm:$0xff]
        %v219 = vld [vmem:[#allocation2 + $0x8] sm:$0xff]
        %v220 = vld [vmem:[#allocation2 + $0x10] sm:$0xff]
        %v221 = vld [vmem:[#allocation2 + $0x18] sm:$0xff]
        %v222 = vld [vmem:[#allocation2 + $0x20] sm:$0xff]
        %v223 = vld [vmem:[#allocation2 + $0x28] sm:$0xff]
        %v224 = vld [vmem:[#allocation2 + $0x30] sm:$0xff]
        %v225 = vld [vmem:[#allocation2 + $0x38] sm:$0xff]
        %v226 = vld [vmem:[#allocation2 + $0x40] sm:$0xff]
        %v227 = vld [vmem:[#allocation2 + $0x48] sm:$0xff]
        %v228 = vld [vmem:[#allocation2 + $0x50] sm:$0xff]
        %v229 = vld [vmem:[#allocation2 + $0x58] sm:$0xff]
        %v230 = vld [vmem:[#allocation2 + $0x60] sm:$0xff]
        %v231 = vld [vmem:[#allocation2 + $0x68] sm:$0xff]
        %v232 = vld [vmem:[#allocation2 + $0x70] sm:$0xff]
        %v233 = vld [vmem:[#allocation2 + $0x78] sm:$0xff]
        %v234 = vld [vmem:[#allocation2 + $0x80] sm:$0xff]
        %v235 = vld [vmem:[#allocation2 + $0x88] sm:$0xff]
        %v236 = vld [vmem:[#allocation2 + $0x90] sm:$0xff]
        %v237 = vld [vmem:[#allocation2 + $0x98] sm:$0xff]
        %v238 = vld [vmem:[#allocation2 + $0xa0] sm:$0xff]
        %v239 = vld [vmem:[#allocation2 + $0xa8] sm:$0xff]
        %v240 = vld [vmem:[#allocation2 + $0xb0] sm:$0xff]
        %v241 = vld [vmem:[#allocation2 + $0xb8] sm:$0xff]
        %v242 = vld [vmem:[#allocation2 + $0xc0] sm:$0xff]
        %v243 = vld [vmem:[#allocation2 + $0xc8] sm:$0xff]
        %v244 = vld [vmem:[#allocation2 + $0xd0] sm:$0xff]
        %v245 = vld [vmem:[#allocation2 + $0xd8] sm:$0xff]
        %v246 = vld [vmem:[#allocation2 + $0xe0] sm:$0xff]
        %v247 = vld [vmem:[#allocation2 + $0xe8] sm:$0xff]
        %v248 = vld [vmem:[#allocation2 + $0xf0] sm:$0xff]
        %v249 = vld [vmem:[#allocation2 + $0xf8] sm:$0xff]
        %v254 = vunpack.c.l.b16 %v214
        %v255 = vunpack.c.l.b16 %v215
        %v256 = vunpack.c.l.b16 %v216
        %v257 = vunpack.c.l.b16 %v217
        %v258 = vpack.c.b16 %v255, %v254
        %v259 = vpack.c.b16 %v257, %v256
        %v294 = vunpack.c.l.b16 %v218
        %v295 = vunpack.c.h.b16 %v218
        %v296 = vunpack.c.l.b16 %v219
        %v297 = vunpack.c.h.b16 %v219
        %v298 = vunpack.c.l.b16 %v220
        %v299 = vunpack.c.h.b16 %v220
        %v300 = vunpack.c.l.b16 %v221
        %v301 = vunpack.c.h.b16 %v221
        %v302 = vunpack.c.l.b16 %v222
        %v303 = vunpack.c.h.b16 %v222
        %v304 = vunpack.c.l.b16 %v223
        %v305 = vunpack.c.h.b16 %v223
        %v306 = vunpack.c.l.b16 %v224
        %v307 = vunpack.c.h.b16 %v224
        %v308 = vunpack.c.l.b16 %v225
        %v309 = vunpack.c.h.b16 %v225
        %v310 = vunpack.c.l.b16 %v226
        %v311 = vunpack.c.h.b16 %v226
        %v312 = vunpack.c.l.b16 %v227
        %v313 = vunpack.c.h.b16 %v227
        %v314 = vunpack.c.l.b16 %v228
        %v315 = vunpack.c.h.b16 %v228
        %v316 = vunpack.c.l.b16 %v229
        %v317 = vunpack.c.h.b16 %v229
        %v318 = vunpack.c.l.b16 %v230
        %v319 = vunpack.c.h.b16 %v230
        %v320 = vunpack.c.l.b16 %v231
        %v321 = vunpack.c.h.b16 %v231
        %v322 = vunpack.c.l.b16 %v232
        %v323 = vunpack.c.h.b16 %v232
        %v324 = vunpack.c.l.b16 %v233
        %v325 = vunpack.c.h.b16 %v233
        %v326 = vunpack.c.l.b16 %v234
        %v327 = vunpack.c.h.b16 %v234
        %v328 = vunpack.c.l.b16 %v235
        %v329 = vunpack.c.h.b16 %v235
        %v330 = vunpack.c.l.b16 %v236
        %v331 = vunpack.c.h.b16 %v236
        %v332 = vunpack.c.l.b16 %v237
        %v333 = vunpack.c.h.b16 %v237
        %v334 = vunpack.c.l.b16 %v238
        %v335 = vunpack.c.h.b16 %v238
        %v336 = vunpack.c.l.b16 %v239
        %v337 = vunpack.c.h.b16 %v239
        %v338 = vunpack.c.l.b16 %v240
        %v339 = vunpack.c.h.b16 %v240
        %v340 = vunpack.c.l.b16 %v241
        %v341 = vunpack.c.h.b16 %v241
        %v342 = vunpack.c.l.b16 %v242
        %v343 = vunpack.c.h.b16 %v242
        %v344 = vunpack.c.l.b16 %v243
        %v345 = vunpack.c.h.b16 %v243
        %v346 = vunpack.c.l.b16 %v244
        %v347 = vunpack.c.h.b16 %v244
        %v348 = vunpack.c.l.b16 %v245
        %v349 = vunpack.c.h.b16 %v245
        %v350 = vunpack.c.l.b16 %v246
        %v351 = vunpack.c.h.b16 %v246
        %v352 = vunpack.c.l.b16 %v247
        %v353 = vunpack.c.h.b16 %v247
        %v354 = vunpack.c.l.b16 %v248
        %v355 = vunpack.c.h.b16 %v248
        %v356 = vunpack.c.l.b16 %v249
        %v357 = vunpack.c.h.b16 %v249
        %v358 = vpack.c.b16 %v298, %v294
        %v359 = vpack.c.b16 %v299, %v295
        %v360 = vpack.c.b16 %v300, %v296
        %v361 = vpack.c.b16 %v301, %v297
        %v362 = vpack.c.b16 %v306, %v302
        %v363 = vpack.c.b16 %v307, %v303
        %v364 = vpack.c.b16 %v308, %v304
        %v365 = vpack.c.b16 %v309, %v305
        %v366 = vpack.c.b16 %v314, %v310
        %v367 = vpack.c.b16 %v315, %v311
        %v368 = vpack.c.b16 %v316, %v312
        %v369 = vpack.c.b16 %v317, %v313
        %v370 = vpack.c.b16 %v322, %v318
        %v371 = vpack.c.b16 %v323, %v319
        %v372 = vpack.c.b16 %v324, %v320
        %v373 = vpack.c.b16 %v325, %v321
        %v374 = vpack.c.b16 %v330, %v326
        %v375 = vpack.c.b16 %v331, %v327
        %v376 = vpack.c.b16 %v332, %v328
        %v377 = vpack.c.b16 %v333, %v329
        %v378 = vpack.c.b16 %v338, %v334
        %v379 = vpack.c.b16 %v339, %v335
        %v380 = vpack.c.b16 %v340, %v336
        %v381 = vpack.c.b16 %v341, %v337
        %v382 = vpack.c.b16 %v346, %v342
        %v383 = vpack.c.b16 %v347, %v343
        %v384 = vpack.c.b16 %v348, %v344
        %v385 = vpack.c.b16 %v349, %v345
        %v386 = vpack.c.b16 %v354, %v350
        %v387 = vpack.c.b16 %v355, %v351
        %v388 = vpack.c.b16 %v356, %v352
        %v389 = vpack.c.b16 %v357, %v353
        %422 = vmatprep.subr.bf16.mxu0 %v359
        %423 = vmatpush1.bf16.msra.mxu0 %v358
        %424 = vmatprep.subr.bf16.mxu0 %v363
        %425 = vmatpush1.bf16.msra.mxu0 %v362
        %426 = vmatprep.subr.bf16.mxu0 %v367
        %427 = vmatpush1.bf16.msra.mxu0 %v366
        %428 = vmatprep.subr.bf16.mxu0 %v371
        %429 = vmatpush1.bf16.msra.mxu0 %v370
        %430 = vmatprep.subr.bf16.mxu0 %v375
        %431 = vmatpush1.bf16.msra.mxu0 %v374
        %432 = vmatprep.subr.bf16.mxu0 %v379
        %433 = vmatpush1.bf16.msra.mxu0 %v378
        %434 = vmatprep.subr.bf16.mxu0 %v383
        %435 = vmatpush1.bf16.msra.mxu0 %v382
        %436 = vmatprep.subr.bf16.mxu0 %v387
        %437 = vmatpush1.bf16.msra.mxu0 %v386
        %438 = vmatprep.subr.bf16.mxu0 0
        %439 = vmatpush1.bf16.msra.mxu0 0
        %440 = vmatprep.subr.bf16.mxu0 0
        %441 = vmatpush1.bf16.msra.mxu0 0
        %442 = vmatprep.subr.bf16.mxu0 0
        %443 = vmatpush1.bf16.msra.mxu0 0
        %444 = vmatprep.subr.bf16.mxu0 0
        %445 = vmatpush1.bf16.msra.mxu0 0
        %446 = vmatprep.subr.bf16.mxu0 0
        %447 = vmatpush1.bf16.msra.mxu0 0
        %448 = vmatprep.subr.bf16.mxu0 0
        %449 = vmatpush1.bf16.msra.mxu0 0
        %450 = vmatprep.subr.bf16.mxu0 0
        %451 = vmatpush1.bf16.msra.mxu0 0
        %452 = vmatprep.subr.bf16.mxu0 0
        %453 = vmatpush1.bf16.msra.mxu0 0
        %454 = vmatprep.mubr.bf16.mxu0 0
        %455 = vmatmul.mubr.bf16.gmra.mrb[0].mxu0 %v258
        %v456 = vpop.f32.mrb[0].mxu0
        %v457 = vadd.f32 0.0, %v456
        %v458 = vpop.f32.mrb[0].mxu0
        %v459 = vadd.f32 0.0, %v458
        %v460 = vpop.f32.mrb[0].mxu0
        %v461 = vadd.f32 0.0, %v460
        %v462 = vpop.f32.mrb[0].mxu0
        %v463 = vadd.f32 0.0, %v462
        %464 = vmatprep.mubr.bf16.mxu0 0
        %465 = vmatmul.mubr.bf16.gmra.mrb[0].mxu0 %v259
        %v466 = vpop.f32.mrb[0].mxu0
        %v467 = vadd.f32 0.0, %v466
        %v468 = vpop.f32.mrb[0].mxu0
        %v469 = vadd.f32 0.0, %v468
        %v470 = vpop.f32.mrb[0].mxu0
        %v471 = vadd.f32 0.0, %v470
        %v472 = vpop.f32.mrb[0].mxu0
        %v473 = vadd.f32 0.0, %v472
        %474 = vdwg.mxu0
        %475 = vmatprep.subr.bf16.mxu0 %v361
        %476 = vmatpush1.bf16.msra.mxu0 %v360
        %477 = vmatprep.subr.bf16.mxu0 %v365
        %478 = vmatpush1.bf16.msra.mxu0 %v364
        %479 = vmatprep.subr.bf16.mxu0 %v369
        %480 = vmatpush1.bf16.msra.mxu0 %v368
        %481 = vmatprep.subr.bf16.mxu0 %v373
        %482 = vmatpush1.bf16.msra.mxu0 %v372
        %483 = vmatprep.subr.bf16.mxu0 %v377
        %484 = vmatpush1.bf16.msra.mxu0 %v376
        %485 = vmatprep.subr.bf16.mxu0 %v381
        %486 = vmatpush1.bf16.msra.mxu0 %v380
        %487 = vmatprep.subr.bf16.mxu0 %v385
        %488 = vmatpush1.bf16.msra.mxu0 %v384
        %489 = vmatprep.subr.bf16.mxu0 %v389
        %490 = vmatpush1.bf16.msra.mxu0 %v388
        %491 = vmatprep.subr.bf16.mxu0 0
        %492 = vmatpush1.bf16.msra.mxu0 0
        %493 = vmatprep.subr.bf16.mxu0 0
        %494 = vmatpush1.bf16.msra.mxu0 0
        %495 = vmatprep.subr.bf16.mxu0 0
        %496 = vmatpush1.bf16.msra.mxu0 0
        %497 = vmatprep.subr.bf16.mxu0 0
        %498 = vmatpush1.bf16.msra.mxu0 0
        %499 = vmatprep.subr.bf16.mxu0 0
        %500 = vmatpush1.bf16.msra.mxu0 0
        %501 = vmatprep.subr.bf16.mxu0 0
        %502 = vmatpush1.bf16.msra.mxu0 0
        %503 = vmatprep.subr.bf16.mxu0 0
        %504 = vmatpush1.bf16.msra.mxu0 0
        %505 = vmatprep.subr.bf16.mxu0 0
        %506 = vmatpush1.bf16.msra.mxu0 0
        %507 = vmatprep.mubr.bf16.mxu0 0
        %508 = vmatmul.mubr.bf16.gmra.mrb[0].mxu0 %v258
        %v509 = vpop.f32.mrb[0].mxu0
        %v510 = vadd.f32 0.0, %v509
        %v511 = vpop.f32.mrb[0].mxu0
        %v512 = vadd.f32 0.0, %v511
        %v513 = vpop.f32.mrb[0].mxu0
        %v514 = vadd.f32 0.0, %v513
        %v515 = vpop.f32.mrb[0].mxu0
        %v516 = vadd.f32 0.0, %v515
        %517 = vmatprep.mubr.bf16.mxu0 0
        %518 = vmatmul.mubr.bf16.gmra.mrb[0].mxu0 %v259
        %v519 = vpop.f32.mrb[0].mxu0
        %v520 = vadd.f32 0.0, %v519
        %v521 = vpop.f32.mrb[0].mxu0
        %v522 = vadd.f32 0.0, %v521
        %v523 = vpop.f32.mrb[0].mxu0
        %v524 = vadd.f32 0.0, %v523
        %v525 = vpop.f32.mrb[0].mxu0
        %v526 = vadd.f32 0.0, %v525
        %527 = vdwg.mxu0
        %528 = vst [vmem:[%s211] sm:$0xff] %v457
        %529 = vst [vmem:[%s211 + $0x8] sm:$0xff] %v459
        %530 = vst [vmem:[%s211 + $0x10] sm:$0xff] %v510
        %531 = vst [vmem:[%s211 + $0x18] sm:$0xff] %v512
        %532 = vst [vmem:[%s211 + $0x20] sm:$0xff] %v461
        %533 = vst [vmem:[%s211 + $0x28] sm:$0xff] %v463
        %534 = vst [vmem:[%s211 + $0x30] sm:$0xff] %v514
        %535 = vst [vmem:[%s211 + $0x38] sm:$0xff] %v516
        %536 = vst [vmem:[%s211 + $0x40] sm:$0xff] %v467
        %537 = vst [vmem:[%s211 + $0x48] sm:$0xff] %v469
        %538 = vst [vmem:[%s211 + $0x50] sm:$0xff] %v520
        %539 = vst [vmem:[%s211 + $0x58] sm:$0xff] %v522
        %540 = vst [vmem:[%s211 + $0x60] sm:$0xff] %v471
        %541 = vst [vmem:[%s211 + $0x68] sm:$0xff] %v473
        %542 = vst [vmem:[%s211 + $0x70] sm:$0xff] %v524
        %543 = vst [vmem:[%s211 + $0x78] sm:$0xff] %v526
        %p544 = scmp.eq.s32.totalorder %s17, 0
        // Predicated region
        $region33: #{generator_forward.3} parent=27 // pred_check
          %p545 = pneg %p544
        $region34: #{generator_forward.3} parent=27 // pred_check_branch
          %547 = sbr.rel (%p545) target = $region36
        $region35: #{generator_forward.3} parent=27 // pred_region
          %v548 = vlaneseq
          %vm549 = vcmp.ge.s32.totalorder %v548, 0
          %vm550 = vcmp.lt.s32.totalorder %v548, 512
          %vm551 = vmand %vm549, %vm550
          %552 = vst.msk [vmem:[%s3] sm:$0xf] %vm551, 0.0
          %553 = vst.msk [vmem:[%s4] sm:$0xf] %vm551, 0.0
        $region36: #{generator_forward.3} parent=27 // pred_fallthru
          _
        %v554 = vld [vmem:[%s3] sm:$0xf]
        %v555 = vadd.f32 %v457, %v461
        %v556 = vadd.f32 %v555, %v467
        %v557 = vadd.f32 %v556, %v471
        %v558 = vrot.slane %v557, 4
        %v559 = vadd.f32 %v557, %v558
        %v560 = vrot.slane %v559, 2
        %v561 = vadd.f32 %v559, %v560
        %v562 = vrot.slane %v561, 1
        %v563 = vadd.f32 %v561, %v562
        %v564 = vadd.f32 %v459, %v463
        %v565 = vadd.f32 %v564, %v469
        %v566 = vadd.f32 %v565, %v473
        %v567 = vrot.slane %v566, 4
        %v568 = vadd.f32 %v566, %v567
        %v569 = vrot.slane %v568, 2
        %v570 = vadd.f32 %v568, %v569
        %v571 = vrot.slane %v570, 1
        %v572 = vadd.f32 %v570, %v571
        %v573 = vadd.f32 %v510, %v514
        %v574 = vadd.f32 %v573, %v520
        %v575 = vadd.f32 %v574, %v524
        %v576 = vrot.slane %v575, 4
        %v577 = vadd.f32 %v575, %v576
        %v578 = vrot.slane %v577, 2
        %v579 = vadd.f32 %v577, %v578
        %v580 = vrot.slane %v579, 1
        %v581 = vadd.f32 %v579, %v580
        %v582 = vadd.f32 %v512, %v516
        %v583 = vadd.f32 %v582, %v522
        %v584 = vadd.f32 %v583, %v526
        %v585 = vrot.slane %v584, 4
        %v586 = vadd.f32 %v584, %v585
        %v587 = vrot.slane %v586, 2
        %v588 = vadd.f32 %v586, %v587
        %v589 = vrot.slane %v588, 1
        %v590 = vadd.f32 %v588, %v589
        %v595 = vcombine.low %v563, %v572
        %v596 = vcombine.low %v581, %v590
        %v598 = vunpack.c.l.s4 1966171168
        %v599 = vunpack.c.0.s8 %v598
        %v600 = vlaneseq
        %v601 = vshrl.u32 %v600, 7
        %v602 = vsub.s32 %v599, %v601
        %v603 = vrot.slane %v595, %v602
        %v605 = vunpack.c.l.s4 1966171168
        %v606 = vunpack.c.0.s8 %v605
        %v607 = vlaneseq
        %v608 = vshrl.u32 %v607, 7
        %v609 = vsub.s32 %v606, %v608
        %v610 = vrot.slane %v596, %v609
        %v611 = vcombine.low %v603, %v610
        %v613 = vunpack.c.l.s4 1966171168
        %v614 = vunpack.c.0.s8 %v613
        %v615 = vlaneseq
        %v616 = vshrl.u32 %v615, 7
        %v617 = vsub.s32 %v614, %v616
        %v618 = vrot.slane %v611, %v617
        %v620 = vadd.f32 %v554, %v618
        %v621 = vlaneseq
        %vm622 = vcmp.ge.s32.totalorder %v621, 0
        %vm623 = vcmp.lt.s32.totalorder %v621, 512
        %vm624 = vmand %vm622, %vm623
        %625 = vst.msk [vmem:[%s3] sm:$0xf] %vm624, %v620
        %v626 = vld [vmem:[%s4] sm:$0xf]
        %v627 = vmul.f32 %v457, %v457
        %v628 = vmul.f32 %v459, %v459
        %v629 = vmul.f32 %v510, %v510
        %v630 = vmul.f32 %v512, %v512
        %v631 = vmul.f32 %v461, %v461
        %v632 = vmul.f32 %v463, %v463
        %v633 = vmul.f32 %v514, %v514
        %v634 = vmul.f32 %v516, %v516
        %v635 = vmul.f32 %v467, %v467
        %v636 = vmul.f32 %v469, %v469
        %v637 = vmul.f32 %v520, %v520
        %v638 = vmul.f32 %v522, %v522
        %v639 = vmul.f32 %v471, %v471
        %v640 = vmul.f32 %v473, %v473
        %v641 = vmul.f32 %v524, %v524
        %v642 = vmul.f32 %v526, %v526
        %v643 = vadd.f32 %v627, %v631
        %v644 = vadd.f32 %v643, %v635
        %v645 = vadd.f32 %v644, %v639
        %v646 = vrot.slane %v645, 4
        %v647 = vadd.f32 %v645, %v646
        %v648 = vrot.slane %v647, 2
        %v649 = vadd.f32 %v647, %v648
        %v650 = vrot.slane %v649, 1
        %v651 = vadd.f32 %v649, %v650
        %v652 = vadd.f32 %v628, %v632
        %v653 = vadd.f32 %v652, %v636
        %v654 = vadd.f32 %v653, %v640
        %v655 = vrot.slane %v654, 4
        %v656 = vadd.f32 %v654, %v655
        %v657 = vrot.slane %v656, 2
        %v658 = vadd.f32 %v656, %v657
        %v659 = vrot.slane %v658, 1
        %v660 = vadd.f32 %v658, %v659
        %v661 = vadd.f32 %v629, %v633
        %v662 = vadd.f32 %v661, %v637
        %v663 = vadd.f32 %v662, %v641
        %v664 = vrot.slane %v663, 4
        %v665 = vadd.f32 %v663, %v664
        %v666 = vrot.slane %v665, 2
        %v667 = vadd.f32 %v665, %v666
        %v668 = vrot.slane %v667, 1
        %v669 = vadd.f32 %v667, %v668
        %v670 = vadd.f32 %v630, %v634
        %v671 = vadd.f32 %v670, %v638
        %v672 = vadd.f32 %v671, %v642
        %v673 = vrot.slane %v672, 4
        %v674 = vadd.f32 %v672, %v673
        %v675 = vrot.slane %v674, 2
        %v676 = vadd.f32 %v674, %v675
        %v677 = vrot.slane %v676, 1
        %v678 = vadd.f32 %v676, %v677
        %v683 = vcombine.low %v651, %v660
        %v684 = vcombine.low %v669, %v678
        %v686 = vunpack.c.l.s4 1966171168
        %v687 = vunpack.c.0.s8 %v686
        %v688 = vlaneseq
        %v689 = vshrl.u32 %v688, 7
        %v690 = vsub.s32 %v687, %v689
        %v691 = vrot.slane %v683, %v690
        %v693 = vunpack.c.l.s4 1966171168
        %v694 = vunpack.c.0.s8 %v693
        %v695 = vlaneseq
        %v696 = vshrl.u32 %v695, 7
        %v697 = vsub.s32 %v694, %v696
        %v698 = vrot.slane %v684, %v697
        %v699 = vcombine.low %v691, %v698
        %v701 = vunpack.c.l.s4 1966171168
        %v702 = vunpack.c.0.s8 %v701
        %v703 = vlaneseq
        %v704 = vshrl.u32 %v703, 7
        %v705 = vsub.s32 %v702, %v704
        %v706 = vrot.slane %v699, %v705
        %v708 = vadd.f32 %v626, %v706
        %709 = vst.msk [vmem:[%s4] sm:$0xf] %vm624, %v708
        %s710 = smul.u32 4, %s17
        %p711 = scmp.lt.s32.totalorder %s710, 11
        %s712 = scalar_select %p711, %s710, 11
        %s713 = smul.addr %s712, 4
        %s714 = smul.addr %s713, 8
        %s715 = scalar_lea.vmem %s2, %s714
        // Predicated region
        $region37: #{generator_forward.3} parent=27 // pred_check
          %p716 = pneg %p82
        $region38: #{generator_forward.3} parent=27 // pred_check_branch
          %718 = sbr.rel (%p716) target = $region40
        $region39: #{generator_forward.3} parent=27 // pred_region
          %s719 = smul.u32 4, %s17
        $region40: #{generator_forward.3} parent=27 // pred_fallthru
          _
        // Predicated region
        $region41: #{generator_forward.3} parent=27 // pred_check
          %p720 = pneg %p103
        $region42: #{generator_forward.3} parent=27 // pred_check_branch
          %722 = sbr.rel (%p720) target = $region44
        $region43: #{generator_forward.3} parent=27 // pred_region
          _
        $region44: #{generator_forward.3} parent=27 // pred_fallthru
          _
        // Predicated region
        $region45: #{generator_forward.3} parent=27 // pred_check
          %p723 = pneg %p124
        $region46: #{generator_forward.3} parent=27 // pred_check_branch
          %725 = sbr.rel (%p723) target = $region48
        $region47: #{generator_forward.3} parent=27 // pred_region
          _
        $region48: #{generator_forward.3} parent=27 // pred_fallthru
          _
        // Predicated region
        $region49: #{generator_forward.3} parent=27 // pred_check
          %p726 = pneg %p103
        $region50: #{generator_forward.3} parent=27 // pred_check_branch
          %728 = sbr.rel (%p726) target = $region52
        $region51: #{generator_forward.3} parent=27 // pred_region
          _
        $region52: #{generator_forward.3} parent=27 // pred_fallthru
          _
        // Predicated region
        $region53: #{generator_forward.3} parent=27 // pred_check
          %p729 = pneg %p124
        $region54: #{generator_forward.3} parent=27 // pred_check_branch
          %731 = sbr.rel (%p729) target = $region56
        $region55: #{generator_forward.3} parent=27 // pred_region
          _
        $region56: #{generator_forward.3} parent=27 // pred_fallthru
          _
      $region28: #{generator_forward.3} parent=5 // pred_fallthru
        _
      %p732 = scmp.le.s32.totalorder 2, %s12
      // Predicated region
      $region57: #{generator_forward.3} parent=5 // pred_check
        %p733 = pneg %p732
      $region58: #{generator_forward.3} parent=5 // pred_check_branch
        %735 = sbr.rel (%p733) target = $region60
      $region59: #{generator_forward.3} parent=5 // pred_region
        %s736 = ssub.s32 %s12, 2
        // Predicated region
        $region61: #{generator_forward.3} parent=59 // pred_check
          %p737 = pneg %p88
        $region62: #{generator_forward.3} parent=59 // pred_check_branch
          %739 = sbr.rel (%p737) target = $region64
        $region63: #{generator_forward.3} parent=59 // pred_region
          %s740 = smul.u32 4, %s18
          %p741 = scmp.lt.s32.totalorder %s740, 11
          %s742 = scalar_select %p741, %s740, 11
          %s743 = smul.addr %s742, 4
          %s744 = smul.addr %s743, 8
          %s745 = scalar_lea.vmem %s2, %s744
        $region64: #{generator_forward.3} parent=59 // pred_fallthru
          _
      $region60: #{generator_forward.3} parent=5 // pred_fallthru
        _
    $region6: #{generator_forward.3} parent=1 // loop_footer
      %s16 = sadd.s32 1, %s12
    $region7: #{generator_forward.3} parent=1 // loop_footer_branch
      %11 = sbr.rel target = $region3
    $region8: #{generator_forward.3} parent=1 // loop_exit
      _
    %746 = vsyncpa [#allocation3], 1
    %s747 = scalar_lea.sflag [#allocation3], 1
    %748 = vsyncpa %s747, 1

// kernel: generator_forward.5
$region0: #{generator_forward.5}
  #allocation0 [shape = 'u32[]', space=smem, size = 0x4, offset = 0x4, fixed_abs, tag = 'smem constant byte address 0x4 - core index']
  #allocation1 [shape = 'u32[144,128]{1,0:T(1,128)}', space=vmem, size = 0x12000, scoped, tag = 'internal scratch']
  %s0 = inlined_call_operand.vmem [shape: f32[96,512], index: 0, kind: input, shape index: {}]
  %s1 = inlined_call_operand.vmem [shape: f32[1,512], index: 1, kind: input, shape index: {}]
  %s2 = inlined_call_operand.vmem [shape: f32[1,512], index: 2, kind: input, shape index: {}]
  %s3 = inlined_call_operand.vmem [shape: bf16[512,128], index: 3, kind: input, shape index: {}]
  %s4 = inlined_call_operand.vmem [shape: f32[1,128], index: 4, kind: input, shape index: {}]
  %s5 = inlined_call_operand.vmem [shape: f32[96,128], index: 5, kind: output, shape index: {}]
  %s6 = sld [smem:[#allocation0]]
  $region53: #{generator_forward.5} parent=0
    _
  %s8 = ssub.s32 1, %s6
  %s9 = scalar_select 0, %s8, %s6
  loop: start=0, step=1, limit=5
  $region2: #{generator_forward.5} parent=0 // loop_pre_header
    _
  $region3: #{generator_forward.5} parent=0 // loop_header
    %s11 = sphi 0, %s15
    %p12 = scmp.ge.s32.totalorder %s11, 5
    %s21 = sphi 0, %s23
    %s24 = sphi 0, %s21
    %s25 = sphi 0, %s24
    %s41 = sphi 0, %s25
    %s45 = sphi 0, %s45
    %s47 = sphi 0, %s45
    %s48 = sphi 0, %s47
    %s62 = sphi 0, %s48
    %s66 = sphi 0, %s66
    %s68 = sphi 0, %s66
    %s69 = sphi 0, %s68
    %s83 = sphi 0, %s69
    %s87 = sphi 0, %s87
    %s89 = sphi 0, %s87
    %s90 = sphi 0, %s89
    %s104 = sphi 0, %s90
    %s108 = sphi 0, %s108
    %s110 = sphi 0, %s108
    %s111 = sphi 0, %s110
    %s125 = sphi 0, %s111
    %s131 = sphi 0, %s133
    %s134 = sphi 0, %s131
    %s135 = sphi 0, %s134
    %s151 = sphi 0, %s135
  $region4: #{generator_forward.5} parent=0 // loop_header_branch
    %14 = sbr.rel (%p12) target = $region8
  $region5: #{generator_forward.5} parent=0 // loop_body
    %s16 = ssub.s32 %s11, 1
    %s17 = ssub.s32 %s11, 2
    %s18 = sadd.s32 %s11, 1
    %s19 = ssub.s32 %s11, %s18
    %p20 = scmp.eq.s32.totalorder %s19, 0
    %s22 = sadd.s32 %s21, 1
    %s23 = scalar_select %p20, %s21, %s22
    %p26 = pneg %p20
    %p27 = scmp.eq.s32.totalorder %s11, 2
    %p28 = por %p26, %p27
    %p29 = scmp.ne.s32.totalorder %s21, %s24
    %p30 = scmp.eq.s32.totalorder %s11, 0
    %p31 = por %p29, %p30
    %p32 = scmp.ne.s32.totalorder %s21, %s24
    %p33 = scmp.eq.s32.totalorder %s16, 2
    %p34 = por %p32, %p33
    %p35 = scmp.ne.s32.totalorder %s24, %s25
    %p36 = scmp.eq.s32.totalorder %s16, 0
    %p37 = por %p35, %p36
    %p38 = scmp.ne.s32.totalorder %s24, %s25
    %p39 = scmp.eq.s32.totalorder %s17, 2
    %p40 = por %p38, %p39
    %p42 = scmp.ne.s32.totalorder %s25, %s41
    %p43 = scmp.eq.s32.totalorder %s17, 0
    %p44 = por %p42, %p43
    %s46 = sadd.s32 %s45, 1
    %p49 = scmp.eq.s32.totalorder %s11, 2
    %p50 = scmp.ne.s32.totalorder %s45, %s47
    %p51 = scmp.eq.s32.totalorder %s11, 0
    %p52 = por %p50, %p51
    %p53 = scmp.ne.s32.totalorder %s45, %s47
    %p54 = scmp.eq.s32.totalorder %s16, 2
    %p55 = por %p53, %p54
    %p56 = scmp.ne.s32.totalorder %s47, %s48
    %p57 = scmp.eq.s32.totalorder %s16, 0
    %p58 = por %p56, %p57
    %p59 = scmp.ne.s32.totalorder %s47, %s48
    %p60 = scmp.eq.s32.totalorder %s17, 2
    %p61 = por %p59, %p60
    %p63 = scmp.ne.s32.totalorder %s48, %s62
    %p64 = scmp.eq.s32.totalorder %s17, 0
    %p65 = por %p63, %p64
    %s67 = sadd.s32 %s66, 1
    %p70 = scmp.eq.s32.totalorder %s11, 2
    %p71 = scmp.ne.s32.totalorder %s66, %s68
    %p72 = scmp.eq.s32.totalorder %s11, 0
    %p73 = por %p71, %p72
    %p74 = scmp.ne.s32.totalorder %s66, %s68
    %p75 = scmp.eq.s32.totalorder %s16, 2
    %p76 = por %p74, %p75
    %p77 = scmp.ne.s32.totalorder %s68, %s69
    %p78 = scmp.eq.s32.totalorder %s16, 0
    %p79 = por %p77, %p78
    %p80 = scmp.ne.s32.totalorder %s68, %s69
    %p81 = scmp.eq.s32.totalorder %s17, 2
    %p82 = por %p80, %p81
    %p84 = scmp.ne.s32.totalorder %s69, %s83
    %p85 = scmp.eq.s32.totalorder %s17, 0
    %p86 = por %p84, %p85
    %s88 = sadd.s32 %s87, 1
    %p91 = scmp.eq.s32.totalorder %s11, 2
    %p92 = scmp.ne.s32.totalorder %s87, %s89
    %p93 = scmp.eq.s32.totalorder %s11, 0
    %p94 = por %p92, %p93
    %p95 = scmp.ne.s32.totalorder %s87, %s89
    %p96 = scmp.eq.s32.totalorder %s16, 2
    %p97 = por %p95, %p96
    %p98 = scmp.ne.s32.totalorder %s89, %s90
    %p99 = scmp.eq.s32.totalorder %s16, 0
    %p100 = por %p98, %p99
    %p101 = scmp.ne.s32.totalorder %s89, %s90
    %p102 = scmp.eq.s32.totalorder %s17, 2
    %p103 = por %p101, %p102
    %p105 = scmp.ne.s32.totalorder %s90, %s104
    %p106 = scmp.eq.s32.totalorder %s17, 0
    %p107 = por %p105, %p106
    %s109 = sadd.s32 %s108, 1
    %p112 = scmp.eq.s32.totalorder %s11, 2
    %p113 = scmp.ne.s32.totalorder %s108, %s110
    %p114 = scmp.eq.s32.totalorder %s11, 0
    %p115 = por %p113, %p114
    %p116 = scmp.ne.s32.totalorder %s108, %s110
    %p117 = scmp.eq.s32.totalorder %s16, 2
    %p118 = por %p116, %p117
    %p119 = scmp.ne.s32.totalorder %s110, %s111
    %p120 = scmp.eq.s32.totalorder %s16, 0
    %p121 = por %p119, %p120
    %p122 = scmp.ne.s32.totalorder %s110, %s111
    %p123 = scmp.eq.s32.totalorder %s17, 2
    %p124 = por %p122, %p123
    %p126 = scmp.ne.s32.totalorder %s111, %s125
    %p127 = scmp.eq.s32.totalorder %s17, 0
    %p128 = por %p126, %p127
    %s129 = ssub.s32 %s11, %s18
    %p130 = scmp.eq.s32.totalorder %s129, 0
    %s132 = sadd.s32 %s131, 1
    %s133 = scalar_select %p130, %s131, %s132
    %p136 = pneg %p130
    %p137 = scmp.eq.s32.totalorder %s11, 2
    %p138 = por %p136, %p137
    %p139 = scmp.ne.s32.totalorder %s131, %s134
    %p140 = scmp.eq.s32.totalorder %s11, 0
    %p141 = por %p139, %p140
    %p142 = scmp.ne.s32.totalorder %s131, %s134
    %p143 = scmp.eq.s32.totalorder %s16, 2
    %p144 = por %p142, %p143
    %p145 = scmp.ne.s32.totalorder %s134, %s135
    %p146 = scmp.eq.s32.totalorder %s16, 0
    %p147 = por %p145, %p146
    %p148 = scmp.ne.s32.totalorder %s134, %s135
    %p149 = scmp.eq.s32.totalorder %s17, 2
    %p150 = por %p148, %p149
    %p152 = scmp.ne.s32.totalorder %s135, %s151
    %p153 = scmp.eq.s32.totalorder %s17, 0
    %p154 = por %p152, %p153
    %p155 = scmp.le.s32.totalorder 1, %s11
    %p156 = scmp.lt.s32.totalorder %s11, 4
    %p157 = pnand %p155, %p156
    %p158 = pneg %p157
    // Predicated region
    $region9: #{generator_forward.5} parent=5 // pred_check
      _
    $region10: #{generator_forward.5} parent=5 // pred_check_branch
      %160 = sbr.rel (%p157) target = $region12
    $region11: #{generator_forward.5} parent=5 // pred_region
      %s161 = ssub.s32 %s11, 1
      // Predicated region
      $region13: #{generator_forward.5} parent=11 // pred_check
        %p162 = pneg %p58
      $region14: #{generator_forward.5} parent=11 // pred_check_branch
        %164 = sbr.rel (%p162) target = $region16
      $region15: #{generator_forward.5} parent=11 // pred_region
        _
      $region16: #{generator_forward.5} parent=11 // pred_fallthru
        _
      // Predicated region
      $region17: #{generator_forward.5} parent=11 // pred_check
        %p165 = pneg %p79
      $region18: #{generator_forward.5} parent=11 // pred_check_branch
        %167 = sbr.rel (%p165) target = $region20
      $region19: #{generator_forward.5} parent=11 // pred_region
        _
      $region20: #{generator_forward.5} parent=11 // pred_fallthru
        _
      // Predicated region
      $region21: #{generator_forward.5} parent=11 // pred_check
        %p168 = pneg %p100
      $region22: #{generator_forward.5} parent=11 // pred_check_branch
        %170 = sbr.rel (%p168) target = $region24
      $region23: #{generator_forward.5} parent=11 // pred_region
        _
      $region24: #{generator_forward.5} parent=11 // pred_fallthru
        _
      // Predicated region
      $region25: #{generator_forward.5} parent=11 // pred_check
        %p171 = pneg %p121
      $region26: #{generator_forward.5} parent=11 // pred_check_branch
        %173 = sbr.rel (%p171) target = $region28
      $region27: #{generator_forward.5} parent=11 // pred_region
        _
      $region28: #{generator_forward.5} parent=11 // pred_fallthru
        _
    $region12: #{generator_forward.5} parent=5 // pred_fallthru
      _
    %p174 = scmp.lt.s32.totalorder %s11, 3
    // Predicated region
    $region29: #{generator_forward.5} parent=5 // pred_check
      %p175 = pneg %p174
    $region30: #{generator_forward.5} parent=5 // pred_check_branch
      %177 = sbr.rel (%p175) target = $region32
    $region31: #{generator_forward.5} parent=5 // pred_region
      // Predicated region
      $region33: #{generator_forward.5} parent=31 // pred_check
        %p178 = pneg %p31
      $region34: #{generator_forward.5} parent=31 // pred_check_branch
        %180 = sbr.rel (%p178) target = $region36
      $region35: #{generator_forward.5} parent=31 // pred_region
        %s181 = smul.u32 4, %s11
        %p182 = scmp.lt.s32.totalorder %s181, 11
        %s183 = scalar_select %p182, %s181, 11
        %s184 = smul.addr %s183, 4
        %s185 = smul.addr %s184, 8
        %s186 = scalar_lea.vmem %s0, %s185
        %s187 = smul.u32 4, %s11
      $region36: #{generator_forward.5} parent=31 // pred_fallthru
        _
    $region32: #{generator_forward.5} parent=5 // pred_fallthru
      _
    %p188 = scmp.le.s32.totalorder 1, %s11
    %p189 = scmp.lt.s32.totalorder %s11, 4
    %p190 = pnand %p188, %p189
    %p191 = pneg %p190
    // Predicated region
    $region37: #{generator_forward.5} parent=5 // pred_check
      _
    $region38: #{generator_forward.5} parent=5 // pred_check_branch
      %193 = sbr.rel (%p190) target = $region40
    $region39: #{generator_forward.5} parent=5 // pred_region
      %s194 = ssub.s32 %s11, 1
      %s195 = smul.u32 4, %s16
      %p196 = scmp.lt.s32.totalorder %s195, 11
      %s197 = scalar_select %p196, %s195, 11
      %s198 = smul.addr %s197, 4
      %s199 = smul.addr %s198, 8
      %s200 = scalar_lea.vmem %s0, %s199
      %p201 = pneg %p37
      %p202 = pneg %p34
      %p203 = pneg %p58
      %p204 = pneg %p55
      %p205 = pneg %p79
      %p206 = pneg %p76
      %p207 = pneg %p100
      %p208 = pneg %p97
      %p209 = pneg %p121
      %p210 = pneg %p118
      %p211 = pneg %p147
      %p212 = pneg %p144
      %s213 = smul.u32 4, %s16
      %p214 = scmp.lt.s32.totalorder %s213, 11
      %s215 = scalar_select %p214, %s213, 11
      %s216 = smul.addr %s215, 8
      %s217 = scalar_lea.vmem %s5, %s216
      %s218 = smul.u32 4, %s16
      %p219 = scmp.lt.s32.totalorder %s218, 11
      %s220 = scalar_select %p219, %s218, 11
      %s221 = smul.addr %s220, 4
      %s222 = smul.addr %s221, 8
      %s223 = scalar_lea.vmem %s0, %s222
      %s224 = smul.u32 4, %s16
      %s225 = smul.u32 4, %s16
      %p226 = scmp.lt.s32.totalorder %s225, 11
      %s227 = scalar_select %p226, %s225, 11
      %s228 = smul.addr %s227, 8
      %s229 = scalar_lea.vmem %s5, %s228
      %s230 = smul.u32 4, %s16
      %v232 = vld [vmem:[%s223] sm:$0xff]
      %v233 = vld [vmem:[%s223 + $0x8] sm:$0xff]
      %v234 = vld [vmem:[%s223 + $0x10] sm:$0xff]
      %v235 = vld [vmem:[%s223 + $0x18] sm:$0xff]
      %v236 = vld [vmem:[%s223 + $0x20] sm:$0xff]
      %v237 = vld [vmem:[%s223 + $0x28] sm:$0xff]
      %v238 = vld [vmem:[%s223 + $0x30] sm:$0xff]
      %v239 = vld [vmem:[%s223 + $0x38] sm:$0xff]
      %v240 = vld [vmem:[%s223 + $0x40] sm:$0xff]
      %v241 = vld [vmem:[%s223 + $0x48] sm:$0xff]
      %v242 = vld [vmem:[%s223 + $0x50] sm:$0xff]
      %v243 = vld [vmem:[%s223 + $0x58] sm:$0xff]
      %v244 = vld [vmem:[%s223 + $0x60] sm:$0xff]
      %v245 = vld [vmem:[%s223 + $0x68] sm:$0xff]
      %v246 = vld [vmem:[%s223 + $0x70] sm:$0xff]
      %v247 = vld [vmem:[%s223 + $0x78] sm:$0xff]
      %v248 = vld [vmem:[%s1] sm:$0xf]
      %v250 = vlaneseq
      %v251 = vshrl.u32 %v250, 7
      %v252 = vsub.s32 0, %v251
      %v253 = vrot.slane %v248, %v252
      %v254 = vlaneseq
      %v255 = vshrl.u32 %v254, 7
      %v256 = vsub.s32 1, %v255
      %v257 = vrot.slane %v248, %v256
      %v258 = vlaneseq
      %v259 = vshrl.u32 %v258, 7
      %v260 = vsub.s32 2, %v259
      %v261 = vrot.slane %v248, %v260
      %v262 = vlaneseq
      %v263 = vshrl.u32 %v262, 7
      %v264 = vsub.s32 3, %v263
      %v265 = vrot.slane %v248, %v264
      %v270 = vmul.f32 %v232, %v253
      %v271 = vmul.f32 %v233, %v257
      %v272 = vmul.f32 %v234, %v261
      %v273 = vmul.f32 %v235, %v265
      %v274 = vmul.f32 %v236, %v253
      %v275 = vmul.f32 %v237, %v257
      %v276 = vmul.f32 %v238, %v261
      %v277 = vmul.f32 %v239, %v265
      %v278 = vmul.f32 %v240, %v253
      %v279 = vmul.f32 %v241, %v257
      %v280 = vmul.f32 %v242, %v261
      %v281 = vmul.f32 %v243, %v265
      %v282 = vmul.f32 %v244, %v253
      %v283 = vmul.f32 %v245, %v257
      %v284 = vmul.f32 %v246, %v261
      %v285 = vmul.f32 %v247, %v265
      %v286 = vld [vmem:[%s2] sm:$0xf]
      %v288 = vlaneseq
      %v289 = vshrl.u32 %v288, 7
      %v290 = vsub.s32 0, %v289
      %v291 = vrot.slane %v286, %v290
      %v292 = vlaneseq
      %v293 = vshrl.u32 %v292, 7
      %v294 = vsub.s32 1, %v293
      %v295 = vrot.slane %v286, %v294
      %v296 = vlaneseq
      %v297 = vshrl.u32 %v296, 7
      %v298 = vsub.s32 2, %v297
      %v299 = vrot.slane %v286, %v298
      %v300 = vlaneseq
      %v301 = vshrl.u32 %v300, 7
      %v302 = vsub.s32 3, %v301
      %v303 = vrot.slane %v286, %v302
      %v308 = vadd.f32 %v270, %v291
      %v309 = vadd.f32 %v271, %v295
      %v310 = vadd.f32 %v272, %v299
      %v311 = vadd.f32 %v273, %v303
      %v312 = vadd.f32 %v274, %v291
      %v313 = vadd.f32 %v275, %v295
      %v314 = vadd.f32 %v276, %v299
      %v315 = vadd.f32 %v277, %v303
      %v316 = vadd.f32 %v278, %v291
      %v317 = vadd.f32 %v279, %v295
      %v318 = vadd.f32 %v280, %v299
      %v319 = vadd.f32 %v281, %v303
      %v320 = vadd.f32 %v282, %v291
      %v321 = vadd.f32 %v283, %v295
      %v322 = vadd.f32 %v284, %v299
      %v323 = vadd.f32 %v285, %v303
      %v324 = vmax.f32 %v308, 0.0
      %v325 = vmax.f32 %v309, 0.0
      %v326 = vmax.f32 %v310, 0.0
      %v327 = vmax.f32 %v311, 0.0
      %v328 = vmax.f32 %v312, 0.0
      %v329 = vmax.f32 %v313, 0.0
      %v330 = vmax.f32 %v314, 0.0
      %v331 = vmax.f32 %v315, 0.0
      %v332 = vmax.f32 %v316, 0.0
      %v333 = vmax.f32 %v317, 0.0
      %v334 = vmax.f32 %v318, 0.0
      %v335 = vmax.f32 %v319, 0.0
      %v336 = vmax.f32 %v320, 0.0
      %v337 = vmax.f32 %v321, 0.0
      %v338 = vmax.f32 %v322, 0.0
      %v339 = vmax.f32 %v323, 0.0
      %v340 = vpack.c.bf16 %v328, %v324
      %v341 = vpack.c.bf16 %v329, %v325
      %v342 = vpack.c.bf16 %v330, %v326
      %v343 = vpack.c.bf16 %v331, %v327
      %v344 = vpack.c.bf16 %v336, %v332
      %v345 = vpack.c.bf16 %v337, %v333
      %v346 = vpack.c.bf16 %v338, %v334
      %v347 = vpack.c.bf16 %v339, %v335
      %v348 = vld [vmem:[%s3] sm:$0xf]
      %v349 = vld [vmem:[%s3 + $0x4] sm:$0xf]
      %v350 = vld [vmem:[%s3 + $0x8] sm:$0xf]
      %v351 = vld [vmem:[%s3 + $0xc] sm:$0xf]
      %v352 = vld [vmem:[%s3 + $0x10] sm:$0xf]
      %v353 = vld [vmem:[%s3 + $0x14] sm:$0xf]
      %v354 = vld [vmem:[%s3 + $0x18] sm:$0xf]
      %v355 = vld [vmem:[%s3 + $0x1c] sm:$0xf]
      %v356 = vld [vmem:[%s3 + $0x20] sm:$0xf]
      %v357 = vld [vmem:[%s3 + $0x24] sm:$0xf]
      %v358 = vld [vmem:[%s3 + $0x28] sm:$0xf]
      %v359 = vld [vmem:[%s3 + $0x2c] sm:$0xf]
      %v360 = vld [vmem:[%s3 + $0x30] sm:$0xf]
      %v361 = vld [vmem:[%s3 + $0x34] sm:$0xf]
      %v362 = vld [vmem:[%s3 + $0x38] sm:$0xf]
      %v363 = vld [vmem:[%s3 + $0x3c] sm:$0xf]
      %v364 = vld [vmem:[%s3 + $0x40] sm:$0xf]
      %v365 = vld [vmem:[%s3 + $0x44] sm:$0xf]
      %v366 = vld [vmem:[%s3 + $0x48] sm:$0xf]
      %v367 = vld [vmem:[%s3 + $0x4c] sm:$0xf]
      %v368 = vld [vmem:[%s3 + $0x50] sm:$0xf]
      %v369 = vld [vmem:[%s3 + $0x54] sm:$0xf]
      %v370 = vld [vmem:[%s3 + $0x58] sm:$0xf]
      %v371 = vld [vmem:[%s3 + $0x5c] sm:$0xf]
      %v372 = vld [vmem:[%s3 + $0x60] sm:$0xf]
      %v373 = vld [vmem:[%s3 + $0x64] sm:$0xf]
      %v374 = vld [vmem:[%s3 + $0x68] sm:$0xf]
      %v375 = vld [vmem:[%s3 + $0x6c] sm:$0xf]
      %v376 = vld [vmem:[%s3 + $0x70] sm:$0xf]
      %v377 = vld [vmem:[%s3 + $0x74] sm:$0xf]
      %v378 = vld [vmem:[%s3 + $0x78] sm:$0xf]
      %v379 = vld [vmem:[%s3 + $0x7c] sm:$0xf]
      %v380 = vld [vmem:[%s3 + $0x80] sm:$0xf]
      %v381 = vld [vmem:[%s3 + $0x84] sm:$0xf]
      %v382 = vld [vmem:[%s3 + $0x88] sm:$0xf]
      %v383 = vld [vmem:[%s3 + $0x8c] sm:$0xf]
      %v384 = vld [vmem:[%s3 + $0x90] sm:$0xf]
      %v385 = vld [vmem:[%s3 + $0x94] sm:$0xf]
      %v386 = vld [vmem:[%s3 + $0x98] sm:$0xf]
      %v387 = vld [vmem:[%s3 + $0x9c] sm:$0xf]
      %v388 = vld [vmem:[%s3 + $0xa0] sm:$0xf]
      %v389 = vld [vmem:[%s3 + $0xa4] sm:$0xf]
      %v390 = vld [vmem:[%s3 + $0xa8] sm:$0xf]
      %v391 = vld [vmem:[%s3 + $0xac] sm:$0xf]
      %v392 = vld [vmem:[%s3 + $0xb0] sm:$0xf]
      %v393 = vld [vmem:[%s3 + $0xb4] sm:$0xf]
      %v394 = vld [vmem:[%s3 + $0xb8] sm:$0xf]
      %v395 = vld [vmem:[%s3 + $0xbc] sm:$0xf]
      %v396 = vld [vmem:[%s3 + $0xc0] sm:$0xf]
      %v397 = vld [vmem:[%s3 + $0xc4] sm:$0xf]
      %v398 = vld [vmem:[%s3 + $0xc8] sm:$0xf]
      %v399 = vld [vmem:[%s3 + $0xcc] sm:$0xf]
      %v400 = vld [vmem:[%s3 + $0xd0] sm:$0xf]
      %v401 = vld [vmem:[%s3 + $0xd4] sm:$0xf]
      %v402 = vld [vmem:[%s3 + $0xd8] sm:$0xf]
      %v403 = vld [vmem:[%s3 + $0xdc] sm:$0xf]
      %v404 = vld [vmem:[%s3 + $0xe0] sm:$0xf]
      %v405 = vld [vmem:[%s3 + $0xe4] sm:$0xf]
      %v406 = vld [vmem:[%s3 + $0xe8] sm:$0xf]
      %v407 = vld [vmem:[%s3 + $0xec] sm:$0xf]
      %v408 = vld [vmem:[%s3 + $0xf0] sm:$0xf]
      %v409 = vld [vmem:[%s3 + $0xf4] sm:$0xf]
      %v410 = vld [vmem:[%s3 + $0xf8] sm:$0xf]
      %v411 = vld [vmem:[%s3 + $0xfc] sm:$0xf]
      %v412 = vld [vmem:[%s4] sm:$0x1]
      %v414 = vlaneseq
      %v415 = vshrl.u32 %v414, 7
      %v416 = vsub.s32 0, %v415
      %v417 = vrot.slane %v412, %v416
      %v483 = vunpack.c.l.b16 %v348
      %v484 = vunpack.c.l.b16 %v349
      %v485 = vunpack.c.l.b16 %v350
      %v486 = vunpack.c.l.b16 %v351
      %v487 = vunpack.c.l.b16 %v352
      %v488 = vunpack.c.l.b16 %v353
      %v489 = vunpack.c.l.b16 %v354
      %v490 = vunpack.c.l.b16 %v355
      %v491 = vunpack.c.l.b16 %v356
      %v492 = vunpack.c.l.b16 %v357
      %v493 = vunpack.c.l.b16 %v358
      %v494 = vunpack.c.l.b16 %v359
      %v495 = vunpack.c.l.b16 %v360
      %v496 = vunpack.c.l.b16 %v361
      %v497 = vunpack.c.l.b16 %v362
      %v498 = vunpack.c.l.b16 %v363
      %v499 = vunpack.c.l.b16 %v364
      %v500 = vunpack.c.l.b16 %v365
      %v501 = vunpack.c.l.b16 %v366
      %v502 = vunpack.c.l.b16 %v367
      %v503 = vunpack.c.l.b16 %v368
      %v504 = vunpack.c.l.b16 %v369
      %v505 = vunpack.c.l.b16 %v370
      %v506 = vunpack.c.l.b16 %v371
      %v507 = vunpack.c.l.b16 %v372
      %v508 = vunpack.c.l.b16 %v373
      %v509 = vunpack.c.l.b16 %v374
      %v510 = vunpack.c.l.b16 %v375
      %v511 = vunpack.c.l.b16 %v376
      %v512 = vunpack.c.l.b16 %v377
      %v513 = vunpack.c.l.b16 %v378
      %v514 = vunpack.c.l.b16 %v379
      %v515 = vunpack.c.l.b16 %v380
      %v516 = vunpack.c.l.b16 %v381
      %v517 = vunpack.c.l.b16 %v382
      %v518 = vunpack.c.l.b16 %v383
      %v519 = vunpack.c.l.b16 %v384
      %v520 = vunpack.c.l.b16 %v385
      %v521 = vunpack.c.l.b16 %v386
      %v522 = vunpack.c.l.b16 %v387
      %v523 = vunpack.c.l.b16 %v388
      %v524 = vunpack.c.l.b16 %v389
      %v525 = vunpack.c.l.b16 %v390
      %v526 = vunpack.c.l.b16 %v391
      %v527 = vunpack.c.l.b16 %v392
      %v528 = vunpack.c.l.b16 %v393
      %v529 = vunpack.c.l.b16 %v394
      %v530 = vunpack.c.l.b16 %v395
      %v531 = vunpack.c.l.b16 %v396
      %v532 = vunpack.c.l.b16 %v397
      %v533 = vunpack.c.l.b16 %v398
      %v534 = vunpack.c.l.b16 %v399
      %v535 = vunpack.c.l.b16 %v400
      %v536 = vunpack.c.l.b16 %v401
      %v537 = vunpack.c.l.b16 %v402
      %v538 = vunpack.c.l.b16 %v403
      %v539 = vunpack.c.l.b16 %v404
      %v540 = vunpack.c.l.b16 %v405
      %v541 = vunpack.c.l.b16 %v406
      %v542 = vunpack.c.l.b16 %v407
      %v543 = vunpack.c.l.b16 %v408
      %v544 = vunpack.c.l.b16 %v409
      %v545 = vunpack.c.l.b16 %v410
      %v546 = vunpack.c.l.b16 %v411
      %v547 = vpack.c.b16 %v484, %v483
      %v548 = vpack.c.b16 %v486, %v485
      %v549 = vpack.c.b16 %v488, %v487
      %v550 = vpack.c.b16 %v490, %v489
      %v551 = vpack.c.b16 %v492, %v491
      %v552 = vpack.c.b16 %v494, %v493
      %v553 = vpack.c.b16 %v496, %v495
      %v554 = vpack.c.b16 %v498, %v497
      %v555 = vpack.c.b16 %v500, %v499
      %v556 = vpack.c.b16 %v502, %v501
      %v557 = vpack.c.b16 %v504, %v503
      %v558 = vpack.c.b16 %v506, %v505
      %v559 = vpack.c.b16 %v508, %v507
      %v560 = vpack.c.b16 %v510, %v509
      %v561 = vpack.c.b16 %v512, %v511
      %v562 = vpack.c.b16 %v514, %v513
      %v563 = vpack.c.b16 %v516, %v515
      %v564 = vpack.c.b16 %v518, %v517
      %v565 = vpack.c.b16 %v520, %v519
      %v566 = vpack.c.b16 %v522, %v521
      %v567 = vpack.c.b16 %v524, %v523
      %v568 = vpack.c.b16 %v526, %v525
      %v569 = vpack.c.b16 %v528, %v527
      %v570 = vpack.c.b16 %v530, %v529
      %v571 = vpack.c.b16 %v532, %v531
      %v572 = vpack.c.b16 %v534, %v533
      %v573 = vpack.c.b16 %v536, %v535
      %v574 = vpack.c.b16 %v538, %v537
      %v575 = vpack.c.b16 %v540, %v539
      %v576 = vpack.c.b16 %v542, %v541
      %v577 = vpack.c.b16 %v544, %v543
      %v578 = vpack.c.b16 %v546, %v545
      %611 = vmatprep.subr.bf16.mxu0 0
      %612 = vmatpush1.bf16.msra.mxu0 %v547
      %613 = vmatprep.subr.bf16.mxu0 0
      %614 = vmatpush1.bf16.msra.mxu0 %v548
      %615 = vmatprep.subr.bf16.mxu0 0
      %616 = vmatpush1.bf16.msra.mxu0 %v549
      %617 = vmatprep.subr.bf16.mxu0 0
      %618 = vmatpush1.bf16.msra.mxu0 %v550
      %619 = vmatprep.subr.bf16.mxu0 0
      %620 = vmatpush1.bf16.msra.mxu0 %v551
      %621 = vmatprep.subr.bf16.mxu0 0
      %622 = vmatpush1.bf16.msra.mxu0 %v552
      %623 = vmatprep.subr.bf16.mxu0 0
      %624 = vmatpush1.bf16.msra.mxu0 %v553
      %625 = vmatprep.subr.bf16.mxu0 0
      %626 = vmatpush1.bf16.msra.mxu0 %v554
      %627 = vmatprep.subr.bf16.mxu0 0
      %628 = vmatpush1.bf16.msra.mxu0 %v555
      %629 = vmatprep.subr.bf16.mxu0 0
      %630 = vmatpush1.bf16.msra.mxu0 %v556
      %631 = vmatprep.subr.bf16.mxu0 0
      %632 = vmatpush1.bf16.msra.mxu0 %v557
      %633 = vmatprep.subr.bf16.mxu0 0
      %634 = vmatpush1.bf16.msra.mxu0 %v558
      %635 = vmatprep.subr.bf16.mxu0 0
      %636 = vmatpush1.bf16.msra.mxu0 %v559
      %637 = vmatprep.subr.bf16.mxu0 0
      %638 = vmatpush1.bf16.msra.mxu0 %v560
      %639 = vmatprep.subr.bf16.mxu0 0
      %640 = vmatpush1.bf16.msra.mxu0 %v561
      %641 = vmatprep.subr.bf16.mxu0 0
      %642 = vmatpush1.bf16.msra.mxu0 %v562
      %643 = vmatprep.mubr.bf16.mxu0 %v341
      %644 = vmatmul.mubr.bf16.gmra.mrb[0].mxu0 %v340
      %v645 = vpop.f32.mrb[0].mxu0
      %v646 = vadd.f32 %v417, %v645
      %v647 = vpop.f32.mrb[0].mxu0
      %v648 = vpop.f32.mrb[0].mxu0
      %v649 = vadd.f32 %v417, %v648
      %v650 = vpop.f32.mrb[0].mxu0
      %651 = vmatprep.mubr.bf16.mxu0 %v345
      %652 = vmatmul.mubr.bf16.gmra.mrb[0].mxu0 %v344
      %v653 = vpop.f32.mrb[0].mxu0
      %v654 = vadd.f32 %v417, %v653
      %v655 = vpop.f32.mrb[0].mxu0
      %v656 = vpop.f32.mrb[0].mxu0
      %v657 = vadd.f32 %v417, %v656
      %v658 = vpop.f32.mrb[0].mxu0
      %659 = vdwg.mxu0
      %660 = vmatprep.subr.bf16.mxu0 0
      %661 = vmatpush1.bf16.msra.mxu0 %v563
      %662 = vmatprep.subr.bf16.mxu0 0
      %663 = vmatpush1.bf16.msra.mxu0 %v564
      %664 = vmatprep.subr.bf16.mxu0 0
      %665 = vmatpush1.bf16.msra.mxu0 %v565
      %666 = vmatprep.subr.bf16.mxu0 0
      %667 = vmatpush1.bf16.msra.mxu0 %v566
      %668 = vmatprep.subr.bf16.mxu0 0
      %669 = vmatpush1.bf16.msra.mxu0 %v567
      %670 = vmatprep.subr.bf16.mxu0 0
      %671 = vmatpush1.bf16.msra.mxu0 %v568
      %672 = vmatprep.subr.bf16.mxu0 0
      %673 = vmatpush1.bf16.msra.mxu0 %v569
      %674 = vmatprep.subr.bf16.mxu0 0
      %675 = vmatpush1.bf16.msra.mxu0 %v570
      %676 = vmatprep.subr.bf16.mxu0 0
      %677 = vmatpush1.bf16.msra.mxu0 %v571
      %678 = vmatprep.subr.bf16.mxu0 0
      %679 = vmatpush1.bf16.msra.mxu0 %v572
      %680 = vmatprep.subr.bf16.mxu0 0
      %681 = vmatpush1.bf16.msra.mxu0 %v573
      %682 = vmatprep.subr.bf16.mxu0 0
      %683 = vmatpush1.bf16.msra.mxu0 %v574
      %684 = vmatprep.subr.bf16.mxu0 0
      %685 = vmatpush1.bf16.msra.mxu0 %v575
      %686 = vmatprep.subr.bf16.mxu0 0
      %687 = vmatpush1.bf16.msra.mxu0 %v576
      %688 = vmatprep.subr.bf16.mxu0 0
      %689 = vmatpush1.bf16.msra.mxu0 %v577
      %690 = vmatprep.subr.bf16.mxu0 0
      %691 = vmatpush1.bf16.msra.mxu0 %v578
      %692 = vmatprep.mubr.bf16.mxu0 %v343
      %693 = vmatmul.mubr.bf16.gmra.mrb[0].mxu0 %v342
      %v694 = vpop.f32.mrb[0].mxu0
      %v695 = vadd.f32 %v646, %v694
      %v696 = vpop.f32.mrb[0].mxu0
      %v697 = vpop.f32.mrb[0].mxu0
      %v698 = vadd.f32 %v649, %v697
      %v699 = vpop.f32.mrb[0].mxu0
      %700 = vmatprep.mubr.bf16.mxu0 %v347
      %701 = vmatmul.mubr.bf16.gmra.mrb[0].mxu0 %v346
      %v702 = vpop.f32.mrb[0].mxu0
      %v703 = vadd.f32 %v654, %v702
      %v704 = vpop.f32.mrb[0].mxu0
      %v705 = vpop.f32.mrb[0].mxu0
      %v706 = vadd.f32 %v657, %v705
      %v707 = vpop.f32.mrb[0].mxu0
      %708 = vdwg.mxu0
      %709 = vst [vmem:[%s229] sm:$0xff] %v695
      %710 = vst [vmem:[%s229 + $0x8] sm:$0xff] %v698
      %711 = vst [vmem:[%s229 + $0x10] sm:$0xff] %v703
      %712 = vst [vmem:[%s229 + $0x18] sm:$0xff] %v706
      %s713 = smul.u32 4, %s16
      %p714 = scmp.lt.s32.totalorder %s713, 11
      %s715 = scalar_select %p714, %s713, 11
      %s716 = smul.addr %s715, 8
      %s717 = scalar_lea.vmem %s5, %s716
      // Predicated region
      $region41: #{generator_forward.5} parent=39 // pred_check
        %p718 = pneg %p144
      $region42: #{generator_forward.5} parent=39 // pred_check_branch
        %720 = sbr.rel (%p718) target = $region44
      $region43: #{generator_forward.5} parent=39 // pred_region
        %s721 = smul.u32 4, %s16
      $region44: #{generator_forward.5} parent=39 // pred_fallthru
        _
    $region40: #{generator_forward.5} parent=5 // pred_fallthru
      _
    %p722 = scmp.le.s32.totalorder 2, %s11
    // Predicated region
    $region45: #{generator_forward.5} parent=5 // pred_check
      %p723 = pneg %p722
    $region46: #{generator_forward.5} parent=5 // pred_check_branch
      %725 = sbr.rel (%p723) target = $region48
    $region47: #{generator_forward.5} parent=5 // pred_region
      %s726 = ssub.s32 %s11, 2
      // Predicated region
      $region49: #{generator_forward.5} parent=47 // pred_check
        %p727 = pneg %p150
      $region50: #{generator_forward.5} parent=47 // pred_check_branch
        %729 = sbr.rel (%p727) target = $region52
      $region51: #{generator_forward.5} parent=47 // pred_region
        %s730 = smul.u32 4, %s17
        %p731 = scmp.lt.s32.totalorder %s730, 11
        %s732 = scalar_select %p731, %s730, 11
        %s733 = smul.addr %s732, 8
        %s734 = scalar_lea.vmem %s5, %s733
      $region52: #{generator_forward.5} parent=47 // pred_fallthru
        _
    $region48: #{generator_forward.5} parent=5 // pred_fallthru
      _
  $region6: #{generator_forward.5} parent=0 // loop_footer
    %s15 = sadd.s32 1, %s11
  $region7: #{generator_forward.5} parent=0 // loop_footer_branch
    %10 = sbr.rel target = $region3
  $region8: #{generator_forward.5} parent=0 // loop_exit
    _

// kernel: generator_forward.4
$region0: #{generator_forward.4}
  #allocation0 [shape = 'u32[]', space=smem, size = 0x4, offset = 0x4, fixed_abs, tag = 'smem constant byte address 0x4 - core index']
  #allocation1 [shape = 'u32[144,128]{1,0:T(1,128)}', space=vmem, size = 0x12000, scoped, tag = 'internal scratch']
  %s0 = inlined_call_operand.vmem [shape: f32[96,512], index: 0, kind: input, shape index: {}]
  %s1 = inlined_call_operand.vmem [shape: f32[1,512], index: 1, kind: input, shape index: {}]
  %s2 = inlined_call_operand.vmem [shape: f32[1,512], index: 2, kind: input, shape index: {}]
  %s3 = inlined_call_operand.hbm [shape: bf16[512,512], index: 3, kind: input, shape index: {}]
  %s4 = inlined_call_operand.vmem [shape: f32[96,512], index: 4, kind: output, shape index: {0}]
  %s5 = inlined_call_operand.vmem [shape: f32[1,512], index: 5, kind: output, shape index: {1}]
  %s6 = inlined_call_operand.vmem [shape: f32[1,512], index: 6, kind: output, shape index: {2}]
  %7 = xla_tuple %s4, %s5, %s6
  %s8 = sld [smem:[#allocation0]]
  $region73: #{generator_forward.4} parent=0
    _
  %s10 = ssub.s32 1, %s8
  %s11 = scalar_select 0, %s10, %s8
  $region1: #{generator_forward.4} parent=0
    #allocation2 [shape = 'u8[524288]{0}', space=vmem, size = 0x80000, scoped, tag = 'input window, operand 3, single buffered']
    #allocation3 [shape = 's32[2]{0}', space=sflag, size = 0x8, scoped, tag = 'scoped memory for generator_forward.4']
    %12 = vsyncpa [#allocation3], 0
    loop: start=0, step=1, limit=5
    $region2: #{generator_forward.4} parent=1 // loop_pre_header
      _
    $region3: #{generator_forward.4} parent=1 // loop_header
      %s14 = sphi 0, %s18
      %p15 = scmp.ge.s32.totalorder %s14, 5
      %s24 = sphi 0, %s26
      %s27 = sphi 0, %s24
      %s28 = sphi 0, %s27
      %s44 = sphi 0, %s28
      %s48 = sphi 0, %s48
      %s50 = sphi 0, %s48
      %s51 = sphi 0, %s50
      %s65 = sphi 0, %s51
      %s69 = sphi 0, %s69
      %s71 = sphi 0, %s69
      %s72 = sphi 0, %s71
      %s86 = sphi 0, %s72
      %s90 = sphi 0, %s90
      %s92 = sphi 0, %s90
      %s93 = sphi 0, %s92
      %s107 = sphi 0, %s93
      %s113 = sphi 0, %s115
      %s116 = sphi 0, %s113
      %s117 = sphi 0, %s116
      %s133 = sphi 0, %s117
      %s137 = sphi 0, %s137
      %s139 = sphi 0, %s137
      %s140 = sphi 0, %s139
      %s154 = sphi 0, %s140
      %s158 = sphi 0, %s158
      %s160 = sphi 0, %s158
      %s161 = sphi 0, %s160
      %s175 = sphi 0, %s161
    $region4: #{generator_forward.4} parent=1 // loop_header_branch
      %17 = sbr.rel (%p15) target = $region8
    $region5: #{generator_forward.4} parent=1 // loop_body
      %s19 = ssub.s32 %s14, 1
      %s20 = ssub.s32 %s14, 2
      %s21 = sadd.s32 %s14, 1
      %s22 = ssub.s32 %s14, %s21
      %p23 = scmp.eq.s32.totalorder %s22, 0
      %s25 = sadd.s32 %s24, 1
      %s26 = scalar_select %p23, %s24, %s25
      %p29 = pneg %p23
      %p30 = scmp.eq.s32.totalorder %s14, 2
      %p31 = por %p29, %p30
      %p32 = scmp.ne.s32.totalorder %s24, %s27
      %p33 = scmp.eq.s32.totalorder %s14, 0
      %p34 = por %p32, %p33
      %p35 = scmp.ne.s32.totalorder %s24, %s27
      %p36 = scmp.eq.s32.totalorder %s19, 2
      %p37 = por %p35, %p36
      %p38 = scmp.ne.s32.totalorder %s27, %s28
      %p39 = scmp.eq.s32.totalorder %s19, 0
      %p40 = por %p38, %p39
      %p41 = scmp.ne.s32.totalorder %s27, %s28
      %p42 = scmp.eq.s32.totalorder %s20, 2
      %p43 = por %p41, %p42
      %p45 = scmp.ne.s32.totalorder %s28, %s44
      %p46 = scmp.eq.s32.totalorder %s20, 0
      %p47 = por %p45, %p46
      %s49 = sadd.s32 %s48, 1
      %p52 = scmp.eq.s32.totalorder %s14, 2
      %p53 = scmp.ne.s32.totalorder %s48, %s50
      %p54 = scmp.eq.s32.totalorder %s14, 0
      %p55 = por %p53, %p54
      %p56 = scmp.ne.s32.totalorder %s48, %s50
      %p57 = scmp.eq.s32.totalorder %s19, 2
      %p58 = por %p56, %p57
      %p59 = scmp.ne.s32.totalorder %s50, %s51
      %p60 = scmp.eq.s32.totalorder %s19, 0
      %p61 = por %p59, %p60
      %p62 = scmp.ne.s32.totalorder %s50, %s51
      %p63 = scmp.eq.s32.totalorder %s20, 2
      %p64 = por %p62, %p63
      %p66 = scmp.ne.s32.totalorder %s51, %s65
      %p67 = scmp.eq.s32.totalorder %s20, 0
      %p68 = por %p66, %p67
      %s70 = sadd.s32 %s69, 1
      %p73 = scmp.eq.s32.totalorder %s14, 2
      %p74 = scmp.ne.s32.totalorder %s69, %s71
      %p75 = scmp.eq.s32.totalorder %s14, 0
      %p76 = por %p74, %p75
      %p77 = scmp.ne.s32.totalorder %s69, %s71
      %p78 = scmp.eq.s32.totalorder %s19, 2
      %p79 = por %p77, %p78
      %p80 = scmp.ne.s32.totalorder %s71, %s72
      %p81 = scmp.eq.s32.totalorder %s19, 0
      %p82 = por %p80, %p81
      %p83 = scmp.ne.s32.totalorder %s71, %s72
      %p84 = scmp.eq.s32.totalorder %s20, 2
      %p85 = por %p83, %p84
      %p87 = scmp.ne.s32.totalorder %s72, %s86
      %p88 = scmp.eq.s32.totalorder %s20, 0
      %p89 = por %p87, %p88
      %s91 = sadd.s32 %s90, 1
      %p94 = scmp.eq.s32.totalorder %s14, 2
      %p95 = scmp.ne.s32.totalorder %s90, %s92
      %p96 = scmp.eq.s32.totalorder %s14, 0
      %p97 = por %p95, %p96
      %p98 = scmp.ne.s32.totalorder %s90, %s92
      %p99 = scmp.eq.s32.totalorder %s19, 2
      %p100 = por %p98, %p99
      %p101 = scmp.ne.s32.totalorder %s92, %s93
      %p102 = scmp.eq.s32.totalorder %s19, 0
      %p103 = por %p101, %p102
      %p104 = scmp.ne.s32.totalorder %s92, %s93
      %p105 = scmp.eq.s32.totalorder %s20, 2
      %p106 = por %p104, %p105
      %p108 = scmp.ne.s32.totalorder %s93, %s107
      %p109 = scmp.eq.s32.totalorder %s20, 0
      %p110 = por %p108, %p109
      %s111 = ssub.s32 %s14, %s21
      %p112 = scmp.eq.s32.totalorder %s111, 0
      %s114 = sadd.s32 %s113, 1
      %s115 = scalar_select %p112, %s113, %s114
      %p118 = pneg %p112
      %p119 = scmp.eq.s32.totalorder %s14, 2
      %p120 = por %p118, %p119
      %p121 = scmp.ne.s32.totalorder %s113, %s116
      %p122 = scmp.eq.s32.totalorder %s14, 0
      %p123 = por %p121, %p122
      %p124 = scmp.ne.s32.totalorder %s113, %s116
      %p125 = scmp.eq.s32.totalorder %s19, 2
      %p126 = por %p124, %p125
      %p127 = scmp.ne.s32.totalorder %s116, %s117
      %p128 = scmp.eq.s32.totalorder %s19, 0
      %p129 = por %p127, %p128
      %p130 = scmp.ne.s32.totalorder %s116, %s117
      %p131 = scmp.eq.s32.totalorder %s20, 2
      %p132 = por %p130, %p131
      %p134 = scmp.ne.s32.totalorder %s117, %s133
      %p135 = scmp.eq.s32.totalorder %s20, 0
      %p136 = por %p134, %p135
      %s138 = sadd.s32 %s137, 1
      %p141 = scmp.eq.s32.totalorder %s14, 2
      %p142 = scmp.ne.s32.totalorder %s137, %s139
      %p143 = scmp.eq.s32.totalorder %s14, 0
      %p144 = por %p142, %p143
      %p145 = scmp.ne.s32.totalorder %s137, %s139
      %p146 = scmp.eq.s32.totalorder %s19, 2
      %p147 = por %p145, %p146
      %p148 = scmp.ne.s32.totalorder %s139, %s140
      %p149 = scmp.eq.s32.totalorder %s19, 0
      %p150 = por %p148, %p149
      %p151 = scmp.ne.s32.totalorder %s139, %s140
      %p152 = scmp.eq.s32.totalorder %s20, 2
      %p153 = por %p151, %p152
      %p155 = scmp.ne.s32.totalorder %s140, %s154
      %p156 = scmp.eq.s32.totalorder %s20, 0
      %p157 = por %p155, %p156
      %s159 = sadd.s32 %s158, 1
      %p162 = scmp.eq.s32.totalorder %s14, 2
      %p163 = scmp.ne.s32.totalorder %s158, %s160
      %p164 = scmp.eq.s32.totalorder %s14, 0
      %p165 = por %p163, %p164
      %p166 = scmp.ne.s32.totalorder %s158, %s160
      %p167 = scmp.eq.s32.totalorder %s19, 2
      %p168 = por %p166, %p167
      %p169 = scmp.ne.s32.totalorder %s160, %s161
      %p170 = scmp.eq.s32.totalorder %s19, 0
      %p171 = por %p169, %p170
      %p172 = scmp.ne.s32.totalorder %s160, %s161
      %p173 = scmp.eq.s32.totalorder %s20, 2
      %p174 = por %p172, %p173
      %p176 = scmp.ne.s32.totalorder %s161, %s175
      %p177 = scmp.eq.s32.totalorder %s20, 0
      %p178 = por %p176, %p177
      %p179 = scmp.le.s32.totalorder 1, %s14
      %p180 = scmp.lt.s32.totalorder %s14, 4
      %p181 = pnand %p179, %p180
      %p182 = pneg %p181
      // Predicated region
      $region9: #{generator_forward.4} parent=5 // pred_check
        _
      $region10: #{generator_forward.4} parent=5 // pred_check_branch
        %184 = sbr.rel (%p181) target = $region12
      $region11: #{generator_forward.4} parent=5 // pred_region
        %s185 = ssub.s32 %s14, 1
        // Predicated region
        $region13: #{generator_forward.4} parent=11 // pred_check
          %p186 = pneg %p61
        $region14: #{generator_forward.4} parent=11 // pred_check_branch
          %188 = sbr.rel (%p186) target = $region16
        $region15: #{generator_forward.4} parent=11 // pred_region
          _
        $region16: #{generator_forward.4} parent=11 // pred_fallthru
          _
        // Predicated region
        $region17: #{generator_forward.4} parent=11 // pred_check
          %p189 = pneg %p82
        $region18: #{generator_forward.4} parent=11 // pred_check_branch
          %191 = sbr.rel (%p189) target = $region20
        $region19: #{generator_forward.4} parent=11 // pred_region
          _
        $region20: #{generator_forward.4} parent=11 // pred_fallthru
          _
        // Predicated region
        $region21: #{generator_forward.4} parent=11 // pred_check
          %p192 = pneg %p103
        $region22: #{generator_forward.4} parent=11 // pred_check_branch
          %194 = sbr.rel (%p192) target = $region24
        $region23: #{generator_forward.4} parent=11 // pred_region
          %s196 = ssub.s32 16384, 16384
          %197 = vsyncadd [#allocation3], %s196
          %s198 = sshll.u32 [#allocation2], 4
          %s199 = int_to_ptr.vmem [resolvable:$true] %s198
          %204 = dma.hbm_to_vmem [thread:$0]  %s3, 16384, %s199, [#allocation3], 256, 256, 16
        $region24: #{generator_forward.4} parent=11 // pred_fallthru
          _
      $region12: #{generator_forward.4} parent=5 // pred_fallthru
        _
      %p205 = scmp.lt.s32.totalorder %s14, 3
      // Predicated region
      $region25: #{generator_forward.4} parent=5 // pred_check
        %p206 = pneg %p205
      $region26: #{generator_forward.4} parent=5 // pred_check_branch
        %208 = sbr.rel (%p206) target = $region28
      $region27: #{generator_forward.4} parent=5 // pred_region
        // Predicated region
        $region29: #{generator_forward.4} parent=27 // pred_check
          %p209 = pneg %p34
        $region30: #{generator_forward.4} parent=27 // pred_check_branch
          %211 = sbr.rel (%p209) target = $region32
        $region31: #{generator_forward.4} parent=27 // pred_region
          %s212 = smul.u32 4, %s14
          %p213 = scmp.lt.s32.totalorder %s212, 11
          %s214 = scalar_select %p213, %s212, 11
          %s215 = smul.addr %s214, 4
          %s216 = smul.addr %s215, 8
          %s217 = scalar_lea.vmem %s0, %s216
          %s218 = smul.u32 4, %s14
        $region32: #{generator_forward.4} parent=27 // pred_fallthru
          _
      $region28: #{generator_forward.4} parent=5 // pred_fallthru
        _
      %p219 = scmp.le.s32.totalorder 1, %s14
      %p220 = scmp.lt.s32.totalorder %s14, 4
      %p221 = pnand %p219, %p220
      %p222 = pneg %p221
      // Predicated region
      $region33: #{generator_forward.4} parent=5 // pred_check
        _
      $region34: #{generator_forward.4} parent=5 // pred_check_branch
        %224 = sbr.rel (%p221) target = $region36
      $region35: #{generator_forward.4} parent=5 // pred_region
        %s225 = ssub.s32 %s14, 1
        // Predicated region
        $region37: #{generator_forward.4} parent=35 // pred_check
          %p226 = pneg %p103
        $region38: #{generator_forward.4} parent=35 // pred_check_branch
          %228 = sbr.rel (%p226) target = $region40
        $region39: #{generator_forward.4} parent=35 // pred_region
          %229 = dma.done [#allocation3], 16384
        $region40: #{generator_forward.4} parent=35 // pred_fallthru
          _
        %s230 = smul.u32 4, %s19
        %p231 = scmp.lt.s32.totalorder %s230, 11
        %s232 = scalar_select %p231, %s230, 11
        %s233 = smul.addr %s232, 4
        %s234 = smul.addr %s233, 8
        %s235 = scalar_lea.vmem %s0, %s234
        %p236 = pneg %p40
        %p237 = pneg %p37
        %p238 = pneg %p61
        %p239 = pneg %p58
        %p240 = pneg %p82
        %p241 = pneg %p79
        %p242 = pneg %p103
        %p243 = pneg %p100
        %p244 = pneg %p129
        %p245 = pneg %p126
        %s246 = smul.u32 4, %s19
        %p247 = scmp.lt.s32.totalorder %s246, 11
        %s248 = scalar_select %p247, %s246, 11
        %s249 = smul.addr %s248, 4
        %s250 = smul.addr %s249, 8
        %s251 = scalar_lea.vmem %s4, %s250
        %p252 = pneg %p150
        %p253 = pneg %p147
        %p254 = pneg %p171
        %p255 = pneg %p168
        %s256 = smul.u32 4, %s19
        %p257 = scmp.lt.s32.totalorder %s256, 11
        %s258 = scalar_select %p257, %s256, 11
        %s259 = smul.addr %s258, 4
        %s260 = smul.addr %s259, 8
        %s261 = scalar_lea.vmem %s0, %s260
        %s262 = smul.u32 4, %s19
        %s263 = smul.u32 4, %s19
        %p264 = scmp.lt.s32.totalorder %s263, 11
        %s265 = scalar_select %p264, %s263, 11
        %s266 = smul.addr %s265, 4
        %s267 = smul.addr %s266, 8
        %s268 = scalar_lea.vmem %s4, %s267
        %s269 = smul.u32 4, %s19
        %v270 = vld [vmem:[%s261] sm:$0xff]
        %v271 = vld [vmem:[%s261 + $0x8] sm:$0xff]
        %v272 = vld [vmem:[%s261 + $0x10] sm:$0xff]
        %v273 = vld [vmem:[%s261 + $0x18] sm:$0xff]
        %v274 = vld [vmem:[%s261 + $0x20] sm:$0xff]
        %v275 = vld [vmem:[%s261 + $0x28] sm:$0xff]
        %v276 = vld [vmem:[%s261 + $0x30] sm:$0xff]
        %v277 = vld [vmem:[%s261 + $0x38] sm:$0xff]
        %v278 = vld [vmem:[%s261 + $0x40] sm:$0xff]
        %v279 = vld [vmem:[%s261 + $0x48] sm:$0xff]
        %v280 = vld [vmem:[%s261 + $0x50] sm:$0xff]
        %v281 = vld [vmem:[%s261 + $0x58] sm:$0xff]
        %v282 = vld [vmem:[%s261 + $0x60] sm:$0xff]
        %v283 = vld [vmem:[%s261 + $0x68] sm:$0xff]
        %v284 = vld [vmem:[%s261 + $0x70] sm:$0xff]
        %v285 = vld [vmem:[%s261 + $0x78] sm:$0xff]
        %v286 = vld [vmem:[%s1] sm:$0xf]
        %v288 = vlaneseq
        %v289 = vshrl.u32 %v288, 7
        %v290 = vsub.s32 0, %v289
        %v291 = vrot.slane %v286, %v290
        %v292 = vlaneseq
        %v293 = vshrl.u32 %v292, 7
        %v294 = vsub.s32 1, %v293
        %v295 = vrot.slane %v286, %v294
        %v296 = vlaneseq
        %v297 = vshrl.u32 %v296, 7
        %v298 = vsub.s32 2, %v297
        %v299 = vrot.slane %v286, %v298
        %v300 = vlaneseq
        %v301 = vshrl.u32 %v300, 7
        %v302 = vsub.s32 3, %v301
        %v303 = vrot.slane %v286, %v302
        %v308 = vmul.f32 %v270, %v291
        %v309 = vmul.f32 %v271, %v295
        %v310 = vmul.f32 %v272, %v299
        %v311 = vmul.f32 %v273, %v303
        %v312 = vmul.f32 %v274, %v291
        %v313 = vmul.f32 %v275, %v295
        %v314 = vmul.f32 %v276, %v299
        %v315 = vmul.f32 %v277, %v303
        %v316 = vmul.f32 %v278, %v291
        %v317 = vmul.f32 %v279, %v295
        %v318 = vmul.f32 %v280, %v299
        %v319 = vmul.f32 %v281, %v303
        %v320 = vmul.f32 %v282, %v291
        %v321 = vmul.f32 %v283, %v295
        %v322 = vmul.f32 %v284, %v299
        %v323 = vmul.f32 %v285, %v303
        %v324 = vld [vmem:[%s2] sm:$0xf]
        %v326 = vlaneseq
        %v327 = vshrl.u32 %v326, 7
        %v328 = vsub.s32 0, %v327
        %v329 = vrot.slane %v324, %v328
        %v330 = vlaneseq
        %v331 = vshrl.u32 %v330, 7
        %v332 = vsub.s32 1, %v331
        %v333 = vrot.slane %v324, %v332
        %v334 = vlaneseq
        %v335 = vshrl.u32 %v334, 7
        %v336 = vsub.s32 2, %v335
        %v337 = vrot.slane %v324, %v336
        %v338 = vlaneseq
        %v339 = vshrl.u32 %v338, 7
        %v340 = vsub.s32 3, %v339
        %v341 = vrot.slane %v324, %v340
        %v346 = vadd.f32 %v308, %v329
        %v347 = vadd.f32 %v309, %v333
        %v348 = vadd.f32 %v310, %v337
        %v349 = vadd.f32 %v311, %v341
        %v350 = vadd.f32 %v312, %v329
        %v351 = vadd.f32 %v313, %v333
        %v352 = vadd.f32 %v314, %v337
        %v353 = vadd.f32 %v315, %v341
        %v354 = vadd.f32 %v316, %v329
        %v355 = vadd.f32 %v317, %v333
        %v356 = vadd.f32 %v318, %v337
        %v357 = vadd.f32 %v319, %v341
        %v358 = vadd.f32 %v320, %v329
        %v359 = vadd.f32 %v321, %v333
        %v360 = vadd.f32 %v322, %v337
        %v361 = vadd.f32 %v323, %v341
        %v362 = vmax.f32 %v346, 0.0
        %v363 = vmax.f32 %v347, 0.0
        %v364 = vmax.f32 %v348, 0.0
        %v365 = vmax.f32 %v349, 0.0
        %v366 = vmax.f32 %v350, 0.0
        %v367 = vmax.f32 %v351, 0.0
        %v368 = vmax.f32 %v352, 0.0
        %v369 = vmax.f32 %v353, 0.0
        %v370 = vmax.f32 %v354, 0.0
        %v371 = vmax.f32 %v355, 0.0
        %v372 = vmax.f32 %v356, 0.0
        %v373 = vmax.f32 %v357, 0.0
        %v374 = vmax.f32 %v358, 0.0
        %v375 = vmax.f32 %v359, 0.0
        %v376 = vmax.f32 %v360, 0.0
        %v377 = vmax.f32 %v361, 0.0
        %s378 = smul.u32 %s19, 32
        %v379 = vlaneseq
        %v380 = vshrl.u32 %v379, 7
        %v381 = vadd.s32 %v380, 8
        %v382 = vadd.s32 %v380, 16
        %v383 = vadd.s32 %v380, 24
        %v384 = vstv %s378
        %v385 = vadd.s32 %v384, %v380
        %v386 = vadd.s32 %v384, %v381
        %v387 = vadd.s32 %v384, %v382
        %v388 = vadd.s32 %v384, %v383
        %vm389 = vcmp.lt.s32.totalorder %v385, 72
        %vm390 = vcmp.lt.s32.totalorder %v386, 72
        %vm391 = vcmp.lt.s32.totalorder %v387, 72
        %vm392 = vcmp.lt.s32.totalorder %v388, 72
        %v393 = vsel %vm389, %v362, 0.0
        %v394 = vsel %vm389, %v363, 0.0
        %v395 = vsel %vm389, %v364, 0.0
        %v396 = vsel %vm389, %v365, 0.0
        %v397 = vsel %vm390, %v366, 0.0
        %v398 = vsel %vm390, %v367, 0.0
        %v399 = vsel %vm390, %v368, 0.0
        %v400 = vsel %vm390, %v369, 0.0
        %v401 = vsel %vm391, %v370, 0.0
        %v402 = vsel %vm391, %v371, 0.0
        %v403 = vsel %vm391, %v372, 0.0
        %v404 = vsel %vm391, %v373, 0.0
        %v405 = vsel %vm392, %v374, 0.0
        %v406 = vsel %vm392, %v375, 0.0
        %v407 = vsel %vm392, %v376, 0.0
        %v408 = vsel %vm392, %v377, 0.0
        %v409 = vpack.c.bf16 %v397, %v393
        %v410 = vpack.c.bf16 %v398, %v394
        %v411 = vpack.c.bf16 %v399, %v395
        %v412 = vpack.c.bf16 %v400, %v396
        %v413 = vpack.c.bf16 %v405, %v401
        %v414 = vpack.c.bf16 %v406, %v402
        %v415 = vpack.c.bf16 %v407, %v403
        %v416 = vpack.c.bf16 %v408, %v404
        %v417 = vld [vmem:[#allocation2] sm:$0xff]
        %v418 = vld [vmem:[#allocation2 + $0x8] sm:$0xff]
        %v419 = vld [vmem:[#allocation2 + $0x10] sm:$0xff]
        %v420 = vld [vmem:[#allocation2 + $0x18] sm:$0xff]
        %v421 = vld [vmem:[#allocation2 + $0x20] sm:$0xff]
        %v422 = vld [vmem:[#allocation2 + $0x28] sm:$0xff]
        %v423 = vld [vmem:[#allocation2 + $0x30] sm:$0xff]
        %v424 = vld [vmem:[#allocation2 + $0x38] sm:$0xff]
        %v425 = vld [vmem:[#allocation2 + $0x40] sm:$0xff]
        %v426 = vld [vmem:[#allocation2 + $0x48] sm:$0xff]
        %v427 = vld [vmem:[#allocation2 + $0x50] sm:$0xff]
        %v428 = vld [vmem:[#allocation2 + $0x58] sm:$0xff]
        %v429 = vld [vmem:[#allocation2 + $0x60] sm:$0xff]
        %v430 = vld [vmem:[#allocation2 + $0x68] sm:$0xff]
        %v431 = vld [vmem:[#allocation2 + $0x70] sm:$0xff]
        %v432 = vld [vmem:[#allocation2 + $0x78] sm:$0xff]
        %v433 = vld [vmem:[#allocation2 + $0x80] sm:$0xff]
        %v434 = vld [vmem:[#allocation2 + $0x88] sm:$0xff]
        %v435 = vld [vmem:[#allocation2 + $0x90] sm:$0xff]
        %v436 = vld [vmem:[#allocation2 + $0x98] sm:$0xff]
        %v437 = vld [vmem:[#allocation2 + $0xa0] sm:$0xff]
        %v438 = vld [vmem:[#allocation2 + $0xa8] sm:$0xff]
        %v439 = vld [vmem:[#allocation2 + $0xb0] sm:$0xff]
        %v440 = vld [vmem:[#allocation2 + $0xb8] sm:$0xff]
        %v441 = vld [vmem:[#allocation2 + $0xc0] sm:$0xff]
        %v442 = vld [vmem:[#allocation2 + $0xc8] sm:$0xff]
        %v443 = vld [vmem:[#allocation2 + $0xd0] sm:$0xff]
        %v444 = vld [vmem:[#allocation2 + $0xd8] sm:$0xff]
        %v445 = vld [vmem:[#allocation2 + $0xe0] sm:$0xff]
        %v446 = vld [vmem:[#allocation2 + $0xe8] sm:$0xff]
        %v447 = vld [vmem:[#allocation2 + $0xf0] sm:$0xff]
        %v448 = vld [vmem:[#allocation2 + $0xf8] sm:$0xff]
        %v449 = vld [vmem:[#allocation2 + $0x100] sm:$0xff]
        %v450 = vld [vmem:[#allocation2 + $0x108] sm:$0xff]
        %v451 = vld [vmem:[#allocation2 + $0x110] sm:$0xff]
        %v452 = vld [vmem:[#allocation2 + $0x118] sm:$0xff]
        %v453 = vld [vmem:[#allocation2 + $0x120] sm:$0xff]
        %v454 = vld [vmem:[#allocation2 + $0x128] sm:$0xff]
        %v455 = vld [vmem:[#allocation2 + $0x130] sm:$0xff]
        %v456 = vld [vmem:[#allocation2 + $0x138] sm:$0xff]
        %v457 = vld [vmem:[#allocation2 + $0x140] sm:$0xff]
        %v458 = vld [vmem:[#allocation2 + $0x148] sm:$0xff]
        %v459 = vld [vmem:[#allocation2 + $0x150] sm:$0xff]
        %v460 = vld [vmem:[#allocation2 + $0x158] sm:$0xff]
        %v461 = vld [vmem:[#allocation2 + $0x160] sm:$0xff]
        %v462 = vld [vmem:[#allocation2 + $0x168] sm:$0xff]
        %v463 = vld [vmem:[#allocation2 + $0x170] sm:$0xff]
        %v464 = vld [vmem:[#allocation2 + $0x178] sm:$0xff]
        %v465 = vld [vmem:[#allocation2 + $0x180] sm:$0xff]
        %v466 = vld [vmem:[#allocation2 + $0x188] sm:$0xff]
        %v467 = vld [vmem:[#allocation2 + $0x190] sm:$0xff]
        %v468 = vld [vmem:[#allocation2 + $0x198] sm:$0xff]
        %v469 = vld [vmem:[#allocation2 + $0x1a0] sm:$0xff]
        %v470 = vld [vmem:[#allocation2 + $0x1a8] sm:$0xff]
        %v471 = vld [vmem:[#allocation2 + $0x1b0] sm:$0xff]
        %v472 = vld [vmem:[#allocation2 + $0x1b8] sm:$0xff]
        %v473 = vld [vmem:[#allocation2 + $0x1c0] sm:$0xff]
        %v474 = vld [vmem:[#allocation2 + $0x1c8] sm:$0xff]
        %v475 = vld [vmem:[#allocation2 + $0x1d0] sm:$0xff]
        %v476 = vld [vmem:[#allocation2 + $0x1d8] sm:$0xff]
        %v477 = vld [vmem:[#allocation2 + $0x1e0] sm:$0xff]
        %v478 = vld [vmem:[#allocation2 + $0x1e8] sm:$0xff]
        %v479 = vld [vmem:[#allocation2 + $0x1f0] sm:$0xff]
        %v480 = vld [vmem:[#allocation2 + $0x1f8] sm:$0xff]
        %v481 = vld [vmem:[#allocation2 + $0x200] sm:$0xff]
        %v482 = vld [vmem:[#allocation2 + $0x208] sm:$0xff]
        %v483 = vld [vmem:[#allocation2 + $0x210] sm:$0xff]
        %v484 = vld [vmem:[#allocation2 + $0x218] sm:$0xff]
        %v485 = vld [vmem:[#allocation2 + $0x220] sm:$0xff]
        %v486 = vld [vmem:[#allocation2 + $0x228] sm:$0xff]
        %v487 = vld [vmem:[#allocation2 + $0x230] sm:$0xff]
        %v488 = vld [vmem:[#allocation2 + $0x238] sm:$0xff]
        %v489 = vld [vmem:[#allocation2 + $0x240] sm:$0xff]
        %v490 = vld [vmem:[#allocation2 + $0x248] sm:$0xff]
        %v491 = vld [vmem:[#allocation2 + $0x250] sm:$0xff]
        %v492 = vld [vmem:[#allocation2 + $0x258] sm:$0xff]
        %v493 = vld [vmem:[#allocation2 + $0x260] sm:$0xff]
        %v494 = vld [vmem:[#allocation2 + $0x268] sm:$0xff]
        %v495 = vld [vmem:[#allocation2 + $0x270] sm:$0xff]
        %v496 = vld [vmem:[#allocation2 + $0x278] sm:$0xff]
        %v497 = vld [vmem:[#allocation2 + $0x280] sm:$0xff]
        %v498 = vld [vmem:[#allocation2 + $0x288] sm:$0xff]
        %v499 = vld [vmem:[#allocation2 + $0x290] sm:$0xff]
        %v500 = vld [vmem:[#allocation2 + $0x298] sm:$0xff]
        %v501 = vld [vmem:[#allocation2 + $0x2a0] sm:$0xff]
        %v502 = vld [vmem:[#allocation2 + $0x2a8] sm:$0xff]
        %v503 = vld [vmem:[#allocation2 + $0x2b0] sm:$0xff]
        %v504 = vld [vmem:[#allocation2 + $0x2b8] sm:$0xff]
        %v505 = vld [vmem:[#allocation2 + $0x2c0] sm:$0xff]
        %v506 = vld [vmem:[#allocation2 + $0x2c8] sm:$0xff]
        %v507 = vld [vmem:[#allocation2 + $0x2d0] sm:$0xff]
        %v508 = vld [vmem:[#allocation2 + $0x2d8] sm:$0xff]
        %v509 = vld [vmem:[#allocation2 + $0x2e0] sm:$0xff]
        %v510 = vld [vmem:[#allocation2 + $0x2e8] sm:$0xff]
        %v511 = vld [vmem:[#allocation2 + $0x2f0] sm:$0xff]
        %v512 = vld [vmem:[#allocation2 + $0x2f8] sm:$0xff]
        %v513 = vld [vmem:[#allocation2 + $0x300] sm:$0xff]
        %v514 = vld [vmem:[#allocation2 + $0x308] sm:$0xff]
        %v515 = vld [vmem:[#allocation2 + $0x310] sm:$0xff]
        %v516 = vld [vmem:[#allocation2 + $0x318] sm:$0xff]
        %v517 = vld [vmem:[#allocation2 + $0x320] sm:$0xff]
        %v518 = vld [vmem:[#allocation2 + $0x328] sm:$0xff]
        %v519 = vld [vmem:[#allocation2 + $0x330] sm:$0xff]
        %v520 = vld [vmem:[#allocation2 + $0x338] sm:$0xff]
        %v521 = vld [vmem:[#allocation2 + $0x340] sm:$0xff]
        %v522 = vld [vmem:[#allocation2 + $0x348] sm:$0xff]
        %v523 = vld [vmem:[#allocation2 + $0x350] sm:$0xff]
        %v524 = vld [vmem:[#allocation2 + $0x358] sm:$0xff]
        %v525 = vld [vmem:[#allocation2 + $0x360] sm:$0xff]
        %v526 = vld [vmem:[#allocation2 + $0x368] sm:$0xff]
        %v527 = vld [vmem:[#allocation2 + $0x370] sm:$0xff]
        %v528 = vld [vmem:[#allocation2 + $0x378] sm:$0xff]
        %v529 = vld [vmem:[#allocation2 + $0x380] sm:$0xff]
        %v530 = vld [vmem:[#allocation2 + $0x388] sm:$0xff]
        %v531 = vld [vmem:[#allocation2 + $0x390] sm:$0xff]
        %v532 = vld [vmem:[#allocation2 + $0x398] sm:$0xff]
        %v533 = vld [vmem:[#allocation2 + $0x3a0] sm:$0xff]
        %v534 = vld [vmem:[#allocation2 + $0x3a8] sm:$0xff]
        %v535 = vld [vmem:[#allocation2 + $0x3b0] sm:$0xff]
        %v536 = vld [vmem:[#allocation2 + $0x3b8] sm:$0xff]
        %v537 = vld [vmem:[#allocation2 + $0x3c0] sm:$0xff]
        %v538 = vld [vmem:[#allocation2 + $0x3c8] sm:$0xff]
        %v539 = vld [vmem:[#allocation2 + $0x3d0] sm:$0xff]
        %v540 = vld [vmem:[#allocation2 + $0x3d8] sm:$0xff]
        %v541 = vld [vmem:[#allocation2 + $0x3e0] sm:$0xff]
        %v542 = vld [vmem:[#allocation2 + $0x3e8] sm:$0xff]
        %v543 = vld [vmem:[#allocation2 + $0x3f0] sm:$0xff]
        %v544 = vld [vmem:[#allocation2 + $0x3f8] sm:$0xff]
        %v673 = vunpack.c.l.b16 %v417
        %v674 = vunpack.c.h.b16 %v417
        %v675 = vunpack.c.l.b16 %v418
        %v676 = vunpack.c.h.b16 %v418
        %v677 = vunpack.c.l.b16 %v419
        %v678 = vunpack.c.h.b16 %v419
        %v679 = vunpack.c.l.b16 %v420
        %v680 = vunpack.c.h.b16 %v420
        %v681 = vunpack.c.l.b16 %v421
        %v682 = vunpack.c.h.b16 %v421
        %v683 = vunpack.c.l.b16 %v422
        %v684 = vunpack.c.h.b16 %v422
        %v685 = vunpack.c.l.b16 %v423
        %v686 = vunpack.c.h.b16 %v423
        %v687 = vunpack.c.l.b16 %v424
        %v688 = vunpack.c.h.b16 %v424
        %v689 = vunpack.c.l.b16 %v425
        %v690 = vunpack.c.h.b16 %v425
        %v691 = vunpack.c.l.b16 %v426
        %v692 = vunpack.c.h.b16 %v426
        %v693 = vunpack.c.l.b16 %v427
        %v694 = vunpack.c.h.b16 %v427
        %v695 = vunpack.c.l.b16 %v428
        %v696 = vunpack.c.h.b16 %v428
        %v697 = vunpack.c.l.b16 %v429
        %v698 = vunpack.c.h.b16 %v429
        %v699 = vunpack.c.l.b16 %v430
        %v700 = vunpack.c.h.b16 %v430
        %v701 = vunpack.c.l.b16 %v431
        %v702 = vunpack.c.h.b16 %v431
        %v703 = vunpack.c.l.b16 %v432
        %v704 = vunpack.c.h.b16 %v432
        %v705 = vunpack.c.l.b16 %v433
        %v706 = vunpack.c.h.b16 %v433
        %v707 = vunpack.c.l.b16 %v434
        %v708 = vunpack.c.h.b16 %v434
        %v709 = vunpack.c.l.b16 %v435
        %v710 = vunpack.c.h.b16 %v435
        %v711 = vunpack.c.l.b16 %v436
        %v712 = vunpack.c.h.b16 %v436
        %v713 = vunpack.c.l.b16 %v437
        %v714 = vunpack.c.h.b16 %v437
        %v715 = vunpack.c.l.b16 %v438
        %v716 = vunpack.c.h.b16 %v438
        %v717 = vunpack.c.l.b16 %v439
        %v718 = vunpack.c.h.b16 %v439
        %v719 = vunpack.c.l.b16 %v440
        %v720 = vunpack.c.h.b16 %v440
        %v721 = vunpack.c.l.b16 %v441
        %v722 = vunpack.c.h.b16 %v441
        %v723 = vunpack.c.l.b16 %v442
        %v724 = vunpack.c.h.b16 %v442
        %v725 = vunpack.c.l.b16 %v443
        %v726 = vunpack.c.h.b16 %v443
        %v727 = vunpack.c.l.b16 %v444
        %v728 = vunpack.c.h.b16 %v444
        %v729 = vunpack.c.l.b16 %v445
        %v730 = vunpack.c.h.b16 %v445
        %v731 = vunpack.c.l.b16 %v446
        %v732 = vunpack.c.h.b16 %v446
        %v733 = vunpack.c.l.b16 %v447
        %v734 = vunpack.c.h.b16 %v447
        %v735 = vunpack.c.l.b16 %v448
        %v736 = vunpack.c.h.b16 %v448
        %v737 = vunpack.c.l.b16 %v449
        %v738 = vunpack.c.h.b16 %v449
        %v739 = vunpack.c.l.b16 %v450
        %v740 = vunpack.c.h.b16 %v450
        %v741 = vunpack.c.l.b16 %v451
        %v742 = vunpack.c.h.b16 %v451
        %v743 = vunpack.c.l.b16 %v452
        %v744 = vunpack.c.h.b16 %v452
        %v745 = vunpack.c.l.b16 %v453
        %v746 = vunpack.c.h.b16 %v453
        %v747 = vunpack.c.l.b16 %v454
        %v748 = vunpack.c.h.b16 %v454
        %v749 = vunpack.c.l.b16 %v455
        %v750 = vunpack.c.h.b16 %v455
        %v751 = vunpack.c.l.b16 %v456
        %v752 = vunpack.c.h.b16 %v456
        %v753 = vunpack.c.l.b16 %v457
        %v754 = vunpack.c.h.b16 %v457
        %v755 = vunpack.c.l.b16 %v458
        %v756 = vunpack.c.h.b16 %v458
        %v757 = vunpack.c.l.b16 %v459
        %v758 = vunpack.c.h.b16 %v459
        %v759 = vunpack.c.l.b16 %v460
        %v760 = vunpack.c.h.b16 %v460
        %v761 = vunpack.c.l.b16 %v461
        %v762 = vunpack.c.h.b16 %v461
        %v763 = vunpack.c.l.b16 %v462
        %v764 = vunpack.c.h.b16 %v462
        %v765 = vunpack.c.l.b16 %v463
        %v766 = vunpack.c.h.b16 %v463
        %v767 = vunpack.c.l.b16 %v464
        %v768 = vunpack.c.h.b16 %v464
        %v769 = vunpack.c.l.b16 %v465
        %v770 = vunpack.c.h.b16 %v465
        %v771 = vunpack.c.l.b16 %v466
        %v772 = vunpack.c.h.b16 %v466
        %v773 = vunpack.c.l.b16 %v467
        %v774 = vunpack.c.h.b16 %v467
        %v775 = vunpack.c.l.b16 %v468
        %v776 = vunpack.c.h.b16 %v468
        %v777 = vunpack.c.l.b16 %v469
        %v778 = vunpack.c.h.b16 %v469
        %v779 = vunpack.c.l.b16 %v470
        %v780 = vunpack.c.h.b16 %v470
        %v781 = vunpack.c.l.b16 %v471
        %v782 = vunpack.c.h.b16 %v471
        %v783 = vunpack.c.l.b16 %v472
        %v784 = vunpack.c.h.b16 %v472
        %v785 = vunpack.c.l.b16 %v473
        %v786 = vunpack.c.h.b16 %v473
        %v787 = vunpack.c.l.b16 %v474
        %v788 = vunpack.c.h.b16 %v474
        %v789 = vunpack.c.l.b16 %v475
        %v790 = vunpack.c.h.b16 %v475
        %v791 = vunpack.c.l.b16 %v476
        %v792 = vunpack.c.h.b16 %v476
        %v793 = vunpack.c.l.b16 %v477
        %v794 = vunpack.c.h.b16 %v477
        %v795 = vunpack.c.l.b16 %v478
        %v796 = vunpack.c.h.b16 %v478
        %v797 = vunpack.c.l.b16 %v479
        %v798 = vunpack.c.h.b16 %v479
        %v799 = vunpack.c.l.b16 %v480
        %v800 = vunpack.c.h.b16 %v480
        %v801 = vunpack.c.l.b16 %v481
        %v802 = vunpack.c.h.b16 %v481
        %v803 = vunpack.c.l.b16 %v482
        %v804 = vunpack.c.h.b16 %v482
        %v805 = vunpack.c.l.b16 %v483
        %v806 = vunpack.c.h.b16 %v483
        %v807 = vunpack.c.l.b16 %v484
        %v808 = vunpack.c.h.b16 %v484
        %v809 = vunpack.c.l.b16 %v485
        %v810 = vunpack.c.h.b16 %v485
        %v811 = vunpack.c.l.b16 %v486
        %v812 = vunpack.c.h.b16 %v486
        %v813 = vunpack.c.l.b16 %v487
        %v814 = vunpack.c.h.b16 %v487
        %v815 = vunpack.c.l.b16 %v488
        %v816 = vunpack.c.h.b16 %v488
        %v817 = vunpack.c.l.b16 %v489
        %v818 = vunpack.c.h.b16 %v489
        %v819 = vunpack.c.l.b16 %v490
        %v820 = vunpack.c.h.b16 %v490
        %v821 = vunpack.c.l.b16 %v491
        %v822 = vunpack.c.h.b16 %v491
        %v823 = vunpack.c.l.b16 %v492
        %v824 = vunpack.c.h.b16 %v492
        %v825 = vunpack.c.l.b16 %v493
        %v826 = vunpack.c.h.b16 %v493
        %v827 = vunpack.c.l.b16 %v494
        %v828 = vunpack.c.h.b16 %v494
        %v829 = vunpack.c.l.b16 %v495
        %v830 = vunpack.c.h.b16 %v495
        %v831 = vunpack.c.l.b16 %v496
        %v832 = vunpack.c.h.b16 %v496
        %v833 = vunpack.c.l.b16 %v497
        %v834 = vunpack.c.h.b16 %v497
        %v835 = vunpack.c.l.b16 %v498
        %v836 = vunpack.c.h.b16 %v498
        %v837 = vunpack.c.l.b16 %v499
        %v838 = vunpack.c.h.b16 %v499
        %v839 = vunpack.c.l.b16 %v500
        %v840 = vunpack.c.h.b16 %v500
        %v841 = vunpack.c.l.b16 %v501
        %v842 = vunpack.c.h.b16 %v501
        %v843 = vunpack.c.l.b16 %v502
        %v844 = vunpack.c.h.b16 %v502
        %v845 = vunpack.c.l.b16 %v503
        %v846 = vunpack.c.h.b16 %v503
        %v847 = vunpack.c.l.b16 %v504
        %v848 = vunpack.c.h.b16 %v504
        %v849 = vunpack.c.l.b16 %v505
        %v850 = vunpack.c.h.b16 %v505
        %v851 = vunpack.c.l.b16 %v506
        %v852 = vunpack.c.h.b16 %v506
        %v853 = vunpack.c.l.b16 %v507
        %v854 = vunpack.c.h.b16 %v507
        %v855 = vunpack.c.l.b16 %v508
        %v856 = vunpack.c.h.b16 %v508
        %v857 = vunpack.c.l.b16 %v509
        %v858 = vunpack.c.h.b16 %v509
        %v859 = vunpack.c.l.b16 %v510
        %v860 = vunpack.c.h.b16 %v510
        %v861 = vunpack.c.l.b16 %v511
        %v862 = vunpack.c.h.b16 %v511
        %v863 = vunpack.c.l.b16 %v512
        %v864 = vunpack.c.h.b16 %v512
        %v865 = vunpack.c.l.b16 %v513
        %v866 = vunpack.c.h.b16 %v513
        %v867 = vunpack.c.l.b16 %v514
        %v868 = vunpack.c.h.b16 %v514
        %v869 = vunpack.c.l.b16 %v515
        %v870 = vunpack.c.h.b16 %v515
        %v871 = vunpack.c.l.b16 %v516
        %v872 = vunpack.c.h.b16 %v516
        %v873 = vunpack.c.l.b16 %v517
        %v874 = vunpack.c.h.b16 %v517
        %v875 = vunpack.c.l.b16 %v518
        %v876 = vunpack.c.h.b16 %v518
        %v877 = vunpack.c.l.b16 %v519
        %v878 = vunpack.c.h.b16 %v519
        %v879 = vunpack.c.l.b16 %v520
        %v880 = vunpack.c.h.b16 %v520
        %v881 = vunpack.c.l.b16 %v521
        %v882 = vunpack.c.h.b16 %v521
        %v883 = vunpack.c.l.b16 %v522
        %v884 = vunpack.c.h.b16 %v522
        %v885 = vunpack.c.l.b16 %v523
        %v886 = vunpack.c.h.b16 %v523
        %v887 = vunpack.c.l.b16 %v524
        %v888 = vunpack.c.h.b16 %v524
        %v889 = vunpack.c.l.b16 %v525
        %v890 = vunpack.c.h.b16 %v525
        %v891 = vunpack.c.l.b16 %v526
        %v892 = vunpack.c.h.b16 %v526
        %v893 = vunpack.c.l.b16 %v527
        %v894 = vunpack.c.h.b16 %v527
        %v895 = vunpack.c.l.b16 %v528
        %v896 = vunpack.c.h.b16 %v528
        %v897 = vunpack.c.l.b16 %v529
        %v898 = vunpack.c.h.b16 %v529
        %v899 = vunpack.c.l.b16 %v530
        %v900 = vunpack.c.h.b16 %v530
        %v901 = vunpack.c.l.b16 %v531
        %v902 = vunpack.c.h.b16 %v531
        %v903 = vunpack.c.l.b16 %v532
        %v904 = vunpack.c.h.b16 %v532
        %v905 = vunpack.c.l.b16 %v533
        %v906 = vunpack.c.h.b16 %v533
        %v907 = vunpack.c.l.b16 %v534
        %v908 = vunpack.c.h.b16 %v534
        %v909 = vunpack.c.l.b16 %v535
        %v910 = vunpack.c.h.b16 %v535
        %v911 = vunpack.c.l.b16 %v536
        %v912 = vunpack.c.h.b16 %v536
        %v913 = vunpack.c.l.b16 %v537
        %v914 = vunpack.c.h.b16 %v537
        %v915 = vunpack.c.l.b16 %v538
        %v916 = vunpack.c.h.b16 %v538
        %v917 = vunpack.c.l.b16 %v539
        %v918 = vunpack.c.h.b16 %v539
        %v919 = vunpack.c.l.b16 %v540
        %v920 = vunpack.c.h.b16 %v540
        %v921 = vunpack.c.l.b16 %v541
        %v922 = vunpack.c.h.b16 %v541
        %v923 = vunpack.c.l.b16 %v542
        %v924 = vunpack.c.h.b16 %v542
        %v925 = vunpack.c.l.b16 %v543
        %v926 = vunpack.c.h.b16 %v543
        %v927 = vunpack.c.l.b16 %v544
        %v928 = vunpack.c.h.b16 %v544
        %v929 = vpack.c.b16 %v677, %v673
        %v930 = vpack.c.b16 %v678, %v674
        %v931 = vpack.c.b16 %v679, %v675
        %v932 = vpack.c.b16 %v680, %v676
        %v933 = vpack.c.b16 %v685, %v681
        %v934 = vpack.c.b16 %v686, %v682
        %v935 = vpack.c.b16 %v687, %v683
        %v936 = vpack.c.b16 %v688, %v684
        %v937 = vpack.c.b16 %v693, %v689
        %v938 = vpack.c.b16 %v694, %v690
        %v939 = vpack.c.b16 %v695, %v691
        %v940 = vpack.c.b16 %v696, %v692
        %v941 = vpack.c.b16 %v701, %v697
        %v942 = vpack.c.b16 %v702, %v698
        %v943 = vpack.c.b16 %v703, %v699
        %v944 = vpack.c.b16 %v704, %v700
        %v945 = vpack.c.b16 %v709, %v705
        %v946 = vpack.c.b16 %v710, %v706
        %v947 = vpack.c.b16 %v711, %v707
        %v948 = vpack.c.b16 %v712, %v708
        %v949 = vpack.c.b16 %v717, %v713
        %v950 = vpack.c.b16 %v718, %v714
        %v951 = vpack.c.b16 %v719, %v715
        %v952 = vpack.c.b16 %v720, %v716
        %v953 = vpack.c.b16 %v725, %v721
        %v954 = vpack.c.b16 %v726, %v722
        %v955 = vpack.c.b16 %v727, %v723
        %v956 = vpack.c.b16 %v728, %v724
        %v957 = vpack.c.b16 %v733, %v729
        %v958 = vpack.c.b16 %v734, %v730
        %v959 = vpack.c.b16 %v735, %v731
        %v960 = vpack.c.b16 %v736, %v732
        %v961 = vpack.c.b16 %v741, %v737
        %v962 = vpack.c.b16 %v742, %v738
        %v963 = vpack.c.b16 %v743, %v739
        %v964 = vpack.c.b16 %v744, %v740
        %v965 = vpack.c.b16 %v749, %v745
        %v966 = vpack.c.b16 %v750, %v746
        %v967 = vpack.c.b16 %v751, %v747
        %v968 = vpack.c.b16 %v752, %v748
        %v969 = vpack.c.b16 %v757, %v753
        %v970 = vpack.c.b16 %v758, %v754
        %v971 = vpack.c.b16 %v759, %v755
        %v972 = vpack.c.b16 %v760, %v756
        %v973 = vpack.c.b16 %v765, %v761
        %v974 = vpack.c.b16 %v766, %v762
        %v975 = vpack.c.b16 %v767, %v763
        %v976 = vpack.c.b16 %v768, %v764
        %v977 = vpack.c.b16 %v773, %v769
        %v978 = vpack.c.b16 %v774, %v770
        %v979 = vpack.c.b16 %v775, %v771
        %v980 = vpack.c.b16 %v776, %v772
        %v981 = vpack.c.b16 %v781, %v777
        %v982 = vpack.c.b16 %v782, %v778
        %v983 = vpack.c.b16 %v783, %v779
        %v984 = vpack.c.b16 %v784, %v780
        %v985 = vpack.c.b16 %v789, %v785
        %v986 = vpack.c.b16 %v790, %v786
        %v987 = vpack.c.b16 %v791, %v787
        %v988 = vpack.c.b16 %v792, %v788
        %v989 = vpack.c.b16 %v797, %v793
        %v990 = vpack.c.b16 %v798, %v794
        %v991 = vpack.c.b16 %v799, %v795
        %v992 = vpack.c.b16 %v800, %v796
        %v993 = vpack.c.b16 %v805, %v801
        %v994 = vpack.c.b16 %v806, %v802
        %v995 = vpack.c.b16 %v807, %v803
        %v996 = vpack.c.b16 %v808, %v804
        %v997 = vpack.c.b16 %v813, %v809
        %v998 = vpack.c.b16 %v814, %v810
        %v999 = vpack.c.b16 %v815, %v811
        %v1000 = vpack.c.b16 %v816, %v812
        %v1001 = vpack.c.b16 %v821, %v817
        %v1002 = vpack.c.b16 %v822, %v818
        %v1003 = vpack.c.b16 %v823, %v819
        %v1004 = vpack.c.b16 %v824, %v820
        %v1005 = vpack.c.b16 %v829, %v825
        %v1006 = vpack.c.b16 %v830, %v826
        %v1007 = vpack.c.b16 %v831, %v827
        %v1008 = vpack.c.b16 %v832, %v828
        %v1009 = vpack.c.b16 %v837, %v833
        %v1010 = vpack.c.b16 %v838, %v834
        %v1011 = vpack.c.b16 %v839, %v835
        %v1012 = vpack.c.b16 %v840, %v836
        %v1013 = vpack.c.b16 %v845, %v841
        %v1014 = vpack.c.b16 %v846, %v842
        %v1015 = vpack.c.b16 %v847, %v843
        %v1016 = vpack.c.b16 %v848, %v844
        %v1017 = vpack.c.b16 %v853, %v849
        %v1018 = vpack.c.b16 %v854, %v850
        %v1019 = vpack.c.b16 %v855, %v851
        %v1020 = vpack.c.b16 %v856, %v852
        %v1021 = vpack.c.b16 %v861, %v857
        %v1022 = vpack.c.b16 %v862, %v858
        %v1023 = vpack.c.b16 %v863, %v859
        %v1024 = vpack.c.b16 %v864, %v860
        %v1025 = vpack.c.b16 %v869, %v865
        %v1026 = vpack.c.b16 %v870, %v866
        %v1027 = vpack.c.b16 %v871, %v867
        %v1028 = vpack.c.b16 %v872, %v868
        %v1029 = vpack.c.b16 %v877, %v873
        %v1030 = vpack.c.b16 %v878, %v874
        %v1031 = vpack.c.b16 %v879, %v875
        %v1032 = vpack.c.b16 %v880, %v876
        %v1033 = vpack.c.b16 %v885, %v881
        %v1034 = vpack.c.b16 %v886, %v882
        %v1035 = vpack.c.b16 %v887, %v883
        %v1036 = vpack.c.b16 %v888, %v884
        %v1037 = vpack.c.b16 %v893, %v889
        %v1038 = vpack.c.b16 %v894, %v890
        %v1039 = vpack.c.b16 %v895, %v891
        %v1040 = vpack.c.b16 %v896, %v892
        %v1041 = vpack.c.b16 %v901, %v897
        %v1042 = vpack.c.b16 %v902, %v898
        %v1043 = vpack.c.b16 %v903, %v899
        %v1044 = vpack.c.b16 %v904, %v900
        %v1045 = vpack.c.b16 %v909, %v905
        %v1046 = vpack.c.b16 %v910, %v906
        %v1047 = vpack.c.b16 %v911, %v907
        %v1048 = vpack.c.b16 %v912, %v908
        %v1049 = vpack.c.b16 %v917, %v913
        %v1050 = vpack.c.b16 %v918, %v914
        %v1051 = vpack.c.b16 %v919, %v915
        %v1052 = vpack.c.b16 %v920, %v916
        %v1053 = vpack.c.b16 %v925, %v921
        %v1054 = vpack.c.b16 %v926, %v922
        %v1055 = vpack.c.b16 %v927, %v923
        %v1056 = vpack.c.b16 %v928, %v924
        %1185 = vmatprep.subr.bf16.mxu0 %v930
        %1186 = vmatpush1.bf16.msra.mxu0 %v929
        %1187 = vmatprep.subr.bf16.mxu0 %v934
        %1188 = vmatpush1.bf16.msra.mxu0 %v933
        %1189 = vmatprep.subr.bf16.mxu0 %v938
        %1190 = vmatpush1.bf16.msra.mxu0 %v937
        %1191 = vmatprep.subr.bf16.mxu0 %v942
        %1192 = vmatpush1.bf16.msra.mxu0 %v941
        %1193 = vmatprep.subr.bf16.mxu0 %v946
        %1194 = vmatpush1.bf16.msra.mxu0 %v945
        %1195 = vmatprep.subr.bf16.mxu0 %v950
        %1196 = vmatpush1.bf16.msra.mxu0 %v949
        %1197 = vmatprep.subr.bf16.mxu0 %v954
        %1198 = vmatpush1.bf16.msra.mxu0 %v953
        %1199 = vmatprep.subr.bf16.mxu0 %v958
        %1200 = vmatpush1.bf16.msra.mxu0 %v957
        %1201 = vmatprep.subr.bf16.mxu0 %v962
        %1202 = vmatpush1.bf16.msra.mxu0 %v961
        %1203 = vmatprep.subr.bf16.mxu0 %v966
        %1204 = vmatpush1.bf16.msra.mxu0 %v965
        %1205 = vmatprep.subr.bf16.mxu0 %v970
        %1206 = vmatpush1.bf16.msra.mxu0 %v969
        %1207 = vmatprep.subr.bf16.mxu0 %v974
        %1208 = vmatpush1.bf16.msra.mxu0 %v973
        %1209 = vmatprep.subr.bf16.mxu0 %v978
        %1210 = vmatpush1.bf16.msra.mxu0 %v977
        %1211 = vmatprep.subr.bf16.mxu0 %v982
        %1212 = vmatpush1.bf16.msra.mxu0 %v981
        %1213 = vmatprep.subr.bf16.mxu0 %v986
        %1214 = vmatpush1.bf16.msra.mxu0 %v985
        %1215 = vmatprep.subr.bf16.mxu0 %v990
        %1216 = vmatpush1.bf16.msra.mxu0 %v989
        %1217 = vmatprep.mubr.bf16.mxu0 %v410
        %1218 = vmatmul.mubr.bf16.gmra.mrb[0].mxu0 %v409
        %v1219 = vpop.f32.mrb[0].mxu0
        %v1220 = vadd.f32 0.0, %v1219
        %v1221 = vpop.f32.mrb[0].mxu0
        %v1222 = vadd.f32 0.0, %v1221
        %v1223 = vpop.f32.mrb[0].mxu0
        %v1224 = vadd.f32 0.0, %v1223
        %v1225 = vpop.f32.mrb[0].mxu0
        %v1226 = vadd.f32 0.0, %v1225
        %1227 = vmatprep.mubr.bf16.mxu0 %v414
        %1228 = vmatmul.mubr.bf16.gmra.mrb[0].mxu0 %v413
        %v1229 = vpop.f32.mrb[0].mxu0
        %v1230 = vadd.f32 0.0, %v1229
        %v1231 = vpop.f32.mrb[0].mxu0
        %v1232 = vadd.f32 0.0, %v1231
        %v1233 = vpop.f32.mrb[0].mxu0
        %v1234 = vadd.f32 0.0, %v1233
        %v1235 = vpop.f32.mrb[0].mxu0
        %v1236 = vadd.f32 0.0, %v1235
        %1237 = vdwg.mxu0
        %1238 = vmatprep.subr.bf16.mxu0 %v994
        %1239 = vmatpush1.bf16.msra.mxu0 %v993
        %1240 = vmatprep.subr.bf16.mxu0 %v998
        %1241 = vmatpush1.bf16.msra.mxu0 %v997
        %1242 = vmatprep.subr.bf16.mxu0 %v1002
        %1243 = vmatpush1.bf16.msra.mxu0 %v1001
        %1244 = vmatprep.subr.bf16.mxu0 %v1006
        %1245 = vmatpush1.bf16.msra.mxu0 %v1005
        %1246 = vmatprep.subr.bf16.mxu0 %v1010
        %1247 = vmatpush1.bf16.msra.mxu0 %v1009
        %1248 = vmatprep.subr.bf16.mxu0 %v1014
        %1249 = vmatpush1.bf16.msra.mxu0 %v1013
        %1250 = vmatprep.subr.bf16.mxu0 %v1018
        %1251 = vmatpush1.bf16.msra.mxu0 %v1017
        %1252 = vmatprep.subr.bf16.mxu0 %v1022
        %1253 = vmatpush1.bf16.msra.mxu0 %v1021
        %1254 = vmatprep.subr.bf16.mxu0 %v1026
        %1255 = vmatpush1.bf16.msra.mxu0 %v1025
        %1256 = vmatprep.subr.bf16.mxu0 %v1030
        %1257 = vmatpush1.bf16.msra.mxu0 %v1029
        %1258 = vmatprep.subr.bf16.mxu0 %v1034
        %1259 = vmatpush1.bf16.msra.mxu0 %v1033
        %1260 = vmatprep.subr.bf16.mxu0 %v1038
        %1261 = vmatpush1.bf16.msra.mxu0 %v1037
        %1262 = vmatprep.subr.bf16.mxu0 %v1042
        %1263 = vmatpush1.bf16.msra.mxu0 %v1041
        %1264 = vmatprep.subr.bf16.mxu0 %v1046
        %1265 = vmatpush1.bf16.msra.mxu0 %v1045
        %1266 = vmatprep.subr.bf16.mxu0 %v1050
        %1267 = vmatpush1.bf16.msra.mxu0 %v1049
        %1268 = vmatprep.subr.bf16.mxu0 %v1054
        %1269 = vmatpush1.bf16.msra.mxu0 %v1053
        %1270 = vmatprep.mubr.bf16.mxu0 %v412
        %1271 = vmatmul.mubr.bf16.gmra.mrb[0].mxu0 %v411
        %v1272 = vpop.f32.mrb[0].mxu0
        %v1273 = vadd.f32 %v1220, %v1272
        %v1274 = vpop.f32.mrb[0].mxu0
        %v1275 = vadd.f32 %v1222, %v1274
        %v1276 = vpop.f32.mrb[0].mxu0
        %v1277 = vadd.f32 %v1224, %v1276
        %v1278 = vpop.f32.mrb[0].mxu0
        %v1279 = vadd.f32 %v1226, %v1278
        %1280 = vmatprep.mubr.bf16.mxu0 %v416
        %1281 = vmatmul.mubr.bf16.gmra.mrb[0].mxu0 %v415
        %v1282 = vpop.f32.mrb[0].mxu0
        %v1283 = vadd.f32 %v1230, %v1282
        %v1284 = vpop.f32.mrb[0].mxu0
        %v1285 = vadd.f32 %v1232, %v1284
        %v1286 = vpop.f32.mrb[0].mxu0
        %v1287 = vadd.f32 %v1234, %v1286
        %v1288 = vpop.f32.mrb[0].mxu0
        %v1289 = vadd.f32 %v1236, %v1288
        %1290 = vdwg.mxu0
        %1291 = vmatprep.subr.bf16.mxu0 %v932
        %1292 = vmatpush1.bf16.msra.mxu0 %v931
        %1293 = vmatprep.subr.bf16.mxu0 %v936
        %1294 = vmatpush1.bf16.msra.mxu0 %v935
        %1295 = vmatprep.subr.bf16.mxu0 %v940
        %1296 = vmatpush1.bf16.msra.mxu0 %v939
        %1297 = vmatprep.subr.bf16.mxu0 %v944
        %1298 = vmatpush1.bf16.msra.mxu0 %v943
        %1299 = vmatprep.subr.bf16.mxu0 %v948
        %1300 = vmatpush1.bf16.msra.mxu0 %v947
        %1301 = vmatprep.subr.bf16.mxu0 %v952
        %1302 = vmatpush1.bf16.msra.mxu0 %v951
        %1303 = vmatprep.subr.bf16.mxu0 %v956
        %1304 = vmatpush1.bf16.msra.mxu0 %v955
        %1305 = vmatprep.subr.bf16.mxu0 %v960
        %1306 = vmatpush1.bf16.msra.mxu0 %v959
        %1307 = vmatprep.subr.bf16.mxu0 %v964
        %1308 = vmatpush1.bf16.msra.mxu0 %v963
        %1309 = vmatprep.subr.bf16.mxu0 %v968
        %1310 = vmatpush1.bf16.msra.mxu0 %v967
        %1311 = vmatprep.subr.bf16.mxu0 %v972
        %1312 = vmatpush1.bf16.msra.mxu0 %v971
        %1313 = vmatprep.subr.bf16.mxu0 %v976
        %1314 = vmatpush1.bf16.msra.mxu0 %v975
        %1315 = vmatprep.subr.bf16.mxu0 %v980
        %1316 = vmatpush1.bf16.msra.mxu0 %v979
        %1317 = vmatprep.subr.bf16.mxu0 %v984
        %1318 = vmatpush1.bf16.msra.mxu0 %v983
        %1319 = vmatprep.subr.bf16.mxu0 %v988
        %1320 = vmatpush1.bf16.msra.mxu0 %v987
        %1321 = vmatprep.subr.bf16.mxu0 %v992
        %1322 = vmatpush1.bf16.msra.mxu0 %v991
        %1323 = vmatprep.mubr.bf16.mxu0 %v410
        %1324 = vmatmul.mubr.bf16.gmra.mrb[0].mxu0 %v409
        %v1325 = vpop.f32.mrb[0].mxu0
        %v1326 = vadd.f32 0.0, %v1325
        %v1327 = vpop.f32.mrb[0].mxu0
        %v1328 = vadd.f32 0.0, %v1327
        %v1329 = vpop.f32.mrb[0].mxu0
        %v1330 = vadd.f32 0.0, %v1329
        %v1331 = vpop.f32.mrb[0].mxu0
        %v1332 = vadd.f32 0.0, %v1331
        %1333 = vmatprep.mubr.bf16.mxu0 %v414
        %1334 = vmatmul.mubr.bf16.gmra.mrb[0].mxu0 %v413
        %v1335 = vpop.f32.mrb[0].mxu0
        %v1336 = vadd.f32 0.0, %v1335
        %v1337 = vpop.f32.mrb[0].mxu0
        %v1338 = vadd.f32 0.0, %v1337
        %v1339 = vpop.f32.mrb[0].mxu0
        %v1340 = vadd.f32 0.0, %v1339
        %v1341 = vpop.f32.mrb[0].mxu0
        %v1342 = vadd.f32 0.0, %v1341
        %1343 = vdwg.mxu0
        %1344 = vmatprep.subr.bf16.mxu0 %v996
        %1345 = vmatpush1.bf16.msra.mxu0 %v995
        %1346 = vmatprep.subr.bf16.mxu0 %v1000
        %1347 = vmatpush1.bf16.msra.mxu0 %v999
        %1348 = vmatprep.subr.bf16.mxu0 %v1004
        %1349 = vmatpush1.bf16.msra.mxu0 %v1003
        %1350 = vmatprep.subr.bf16.mxu0 %v1008
        %1351 = vmatpush1.bf16.msra.mxu0 %v1007
        %1352 = vmatprep.subr.bf16.mxu0 %v1012
        %1353 = vmatpush1.bf16.msra.mxu0 %v1011
        %1354 = vmatprep.subr.bf16.mxu0 %v1016
        %1355 = vmatpush1.bf16.msra.mxu0 %v1015
        %1356 = vmatprep.subr.bf16.mxu0 %v1020
        %1357 = vmatpush1.bf16.msra.mxu0 %v1019
        %1358 = vmatprep.subr.bf16.mxu0 %v1024
        %1359 = vmatpush1.bf16.msra.mxu0 %v1023
        %1360 = vmatprep.subr.bf16.mxu0 %v1028
        %1361 = vmatpush1.bf16.msra.mxu0 %v1027
        %1362 = vmatprep.subr.bf16.mxu0 %v1032
        %1363 = vmatpush1.bf16.msra.mxu0 %v1031
        %1364 = vmatprep.subr.bf16.mxu0 %v1036
        %1365 = vmatpush1.bf16.msra.mxu0 %v1035
        %1366 = vmatprep.subr.bf16.mxu0 %v1040
        %1367 = vmatpush1.bf16.msra.mxu0 %v1039
        %1368 = vmatprep.subr.bf16.mxu0 %v1044
        %1369 = vmatpush1.bf16.msra.mxu0 %v1043
        %1370 = vmatprep.subr.bf16.mxu0 %v1048
        %1371 = vmatpush1.bf16.msra.mxu0 %v1047
        %1372 = vmatprep.subr.bf16.mxu0 %v1052
        %1373 = vmatpush1.bf16.msra.mxu0 %v1051
        %1374 = vmatprep.subr.bf16.mxu0 %v1056
        %1375 = vmatpush1.bf16.msra.mxu0 %v1055
        %1376 = vmatprep.mubr.bf16.mxu0 %v412
        %1377 = vmatmul.mubr.bf16.gmra.mrb[0].mxu0 %v411
        %v1378 = vpop.f32.mrb[0].mxu0
        %v1379 = vadd.f32 %v1326, %v1378
        %v1380 = vpop.f32.mrb[0].mxu0
        %v1381 = vadd.f32 %v1328, %v1380
        %v1382 = vpop.f32.mrb[0].mxu0
        %v1383 = vadd.f32 %v1330, %v1382
        %v1384 = vpop.f32.mrb[0].mxu0
        %v1385 = vadd.f32 %v1332, %v1384
        %1386 = vmatprep.mubr.bf16.mxu0 %v416
        %1387 = vmatmul.mubr.bf16.gmra.mrb[0].mxu0 %v415
        %v1388 = vpop.f32.mrb[0].mxu0
        %v1389 = vadd.f32 %v1336, %v1388
        %v1390 = vpop.f32.mrb[0].mxu0
        %v1391 = vadd.f32 %v1338, %v1390
        %v1392 = vpop.f32.mrb[0].mxu0
        %v1393 = vadd.f32 %v1340, %v1392
        %v1394 = vpop.f32.mrb[0].mxu0
        %v1395 = vadd.f32 %v1342, %v1394
        %1396 = vdwg.mxu0
        %1397 = vst [vmem:[%s268] sm:$0xff] %v1273
        %1398 = vst [vmem:[%s268 + $0x8] sm:$0xff] %v1275
        %1399 = vst [vmem:[%s268 + $0x10] sm:$0xff] %v1379
        %1400 = vst [vmem:[%s268 + $0x18] sm:$0xff] %v1381
        %1401 = vst [vmem:[%s268 + $0x20] sm:$0xff] %v1277
        %1402 = vst [vmem:[%s268 + $0x28] sm:$0xff] %v1279
        %1403 = vst [vmem:[%s268 + $0x30] sm:$0xff] %v1383
        %1404 = vst [vmem:[%s268 + $0x38] sm:$0xff] %v1385
        %1405 = vst [vmem:[%s268 + $0x40] sm:$0xff] %v1283
        %1406 = vst [vmem:[%s268 + $0x48] sm:$0xff] %v1285
        %1407 = vst [vmem:[%s268 + $0x50] sm:$0xff] %v1389
        %1408 = vst [vmem:[%s268 + $0x58] sm:$0xff] %v1391
        %1409 = vst [vmem:[%s268 + $0x60] sm:$0xff] %v1287
        %1410 = vst [vmem:[%s268 + $0x68] sm:$0xff] %v1289
        %1411 = vst [vmem:[%s268 + $0x70] sm:$0xff] %v1393
        %1412 = vst [vmem:[%s268 + $0x78] sm:$0xff] %v1395
        %p1413 = scmp.eq.s32.totalorder %s19, 0
        // Predicated region
        $region41: #{generator_forward.4} parent=35 // pred_check
          %p1414 = pneg %p1413
        $region42: #{generator_forward.4} parent=35 // pred_check_branch
          %1416 = sbr.rel (%p1414) target = $region44
        $region43: #{generator_forward.4} parent=35 // pred_region
          %v1417 = vlaneseq
          %vm1418 = vcmp.ge.s32.totalorder %v1417, 0
          %vm1419 = vcmp.lt.s32.totalorder %v1417, 512
          %vm1420 = vmand %vm1418, %vm1419
          %1421 = vst.msk [vmem:[%s5] sm:$0xf] %vm1420, 0.0
          %1422 = vst.msk [vmem:[%s6] sm:$0xf] %vm1420, 0.0
        $region44: #{generator_forward.4} parent=35 // pred_fallthru
          _
        %v1423 = vld [vmem:[%s5] sm:$0xf]
        %v1424 = vadd.f32 %v1273, %v1277
        %v1425 = vadd.f32 %v1424, %v1283
        %v1426 = vadd.f32 %v1425, %v1287
        %v1427 = vrot.slane %v1426, 4
        %v1428 = vadd.f32 %v1426, %v1427
        %v1429 = vrot.slane %v1428, 2
        %v1430 = vadd.f32 %v1428, %v1429
        %v1431 = vrot.slane %v1430, 1
        %v1432 = vadd.f32 %v1430, %v1431
        %v1433 = vadd.f32 %v1275, %v1279
        %v1434 = vadd.f32 %v1433, %v1285
        %v1435 = vadd.f32 %v1434, %v1289
        %v1436 = vrot.slane %v1435, 4
        %v1437 = vadd.f32 %v1435, %v1436
        %v1438 = vrot.slane %v1437, 2
        %v1439 = vadd.f32 %v1437, %v1438
        %v1440 = vrot.slane %v1439, 1
        %v1441 = vadd.f32 %v1439, %v1440
        %v1442 = vadd.f32 %v1379, %v1383
        %v1443 = vadd.f32 %v1442, %v1389
        %v1444 = vadd.f32 %v1443, %v1393
        %v1445 = vrot.slane %v1444, 4
        %v1446 = vadd.f32 %v1444, %v1445
        %v1447 = vrot.slane %v1446, 2
        %v1448 = vadd.f32 %v1446, %v1447
        %v1449 = vrot.slane %v1448, 1
        %v1450 = vadd.f32 %v1448, %v1449
        %v1451 = vadd.f32 %v1381, %v1385
        %v1452 = vadd.f32 %v1451, %v1391
        %v1453 = vadd.f32 %v1452, %v1395
        %v1454 = vrot.slane %v1453, 4
        %v1455 = vadd.f32 %v1453, %v1454
        %v1456 = vrot.slane %v1455, 2
        %v1457 = vadd.f32 %v1455, %v1456
        %v1458 = vrot.slane %v1457, 1
        %v1459 = vadd.f32 %v1457, %v1458
        %v1464 = vcombine.low %v1432, %v1441
        %v1465 = vcombine.low %v1450, %v1459
        %v1467 = vunpack.c.l.s4 1966171168
        %v1468 = vunpack.c.0.s8 %v1467
        %v1469 = vlaneseq
        %v1470 = vshrl.u32 %v1469, 7
        %v1471 = vsub.s32 %v1468, %v1470
        %v1472 = vrot.slane %v1464, %v1471
        %v1474 = vunpack.c.l.s4 1966171168
        %v1475 = vunpack.c.0.s8 %v1474
        %v1476 = vlaneseq
        %v1477 = vshrl.u32 %v1476, 7
        %v1478 = vsub.s32 %v1475, %v1477
        %v1479 = vrot.slane %v1465, %v1478
        %v1480 = vcombine.low %v1472, %v1479
        %v1482 = vunpack.c.l.s4 1966171168
        %v1483 = vunpack.c.0.s8 %v1482
        %v1484 = vlaneseq
        %v1485 = vshrl.u32 %v1484, 7
        %v1486 = vsub.s32 %v1483, %v1485
        %v1487 = vrot.slane %v1480, %v1486
        %v1489 = vadd.f32 %v1423, %v1487
        %v1490 = vlaneseq
        %vm1491 = vcmp.ge.s32.totalorder %v1490, 0
        %vm1492 = vcmp.lt.s32.totalorder %v1490, 512
        %vm1493 = vmand %vm1491, %vm1492
        %1494 = vst.msk [vmem:[%s5] sm:$0xf] %vm1493, %v1489
        %v1495 = vld [vmem:[%s6] sm:$0xf]
        %v1496 = vmul.f32 %v1273, %v1273
        %v1497 = vmul.f32 %v1275, %v1275
        %v1498 = vmul.f32 %v1379, %v1379
        %v1499 = vmul.f32 %v1381, %v1381
        %v1500 = vmul.f32 %v1277, %v1277
        %v1501 = vmul.f32 %v1279, %v1279
        %v1502 = vmul.f32 %v1383, %v1383
        %v1503 = vmul.f32 %v1385, %v1385
        %v1504 = vmul.f32 %v1283, %v1283
        %v1505 = vmul.f32 %v1285, %v1285
        %v1506 = vmul.f32 %v1389, %v1389
        %v1507 = vmul.f32 %v1391, %v1391
        %v1508 = vmul.f32 %v1287, %v1287
        %v1509 = vmul.f32 %v1289, %v1289
        %v1510 = vmul.f32 %v1393, %v1393
        %v1511 = vmul.f32 %v1395, %v1395
        %v1512 = vadd.f32 %v1496, %v1500
        %v1513 = vadd.f32 %v1512, %v1504
        %v1514 = vadd.f32 %v1513, %v1508
        %v1515 = vrot.slane %v1514, 4
        %v1516 = vadd.f32 %v1514, %v1515
        %v1517 = vrot.slane %v1516, 2
        %v1518 = vadd.f32 %v1516, %v1517
        %v1519 = vrot.slane %v1518, 1
        %v1520 = vadd.f32 %v1518, %v1519
        %v1521 = vadd.f32 %v1497, %v1501
        %v1522 = vadd.f32 %v1521, %v1505
        %v1523 = vadd.f32 %v1522, %v1509
        %v1524 = vrot.slane %v1523, 4
        %v1525 = vadd.f32 %v1523, %v1524
        %v1526 = vrot.slane %v1525, 2
        %v1527 = vadd.f32 %v1525, %v1526
        %v1528 = vrot.slane %v1527, 1
        %v1529 = vadd.f32 %v1527, %v1528
        %v1530 = vadd.f32 %v1498, %v1502
        %v1531 = vadd.f32 %v1530, %v1506
        %v1532 = vadd.f32 %v1531, %v1510
        %v1533 = vrot.slane %v1532, 4
        %v1534 = vadd.f32 %v1532, %v1533
        %v1535 = vrot.slane %v1534, 2
        %v1536 = vadd.f32 %v1534, %v1535
        %v1537 = vrot.slane %v1536, 1
        %v1538 = vadd.f32 %v1536, %v1537
        %v1539 = vadd.f32 %v1499, %v1503
        %v1540 = vadd.f32 %v1539, %v1507
        %v1541 = vadd.f32 %v1540, %v1511
        %v1542 = vrot.slane %v1541, 4
        %v1543 = vadd.f32 %v1541, %v1542
        %v1544 = vrot.slane %v1543, 2
        %v1545 = vadd.f32 %v1543, %v1544
        %v1546 = vrot.slane %v1545, 1
        %v1547 = vadd.f32 %v1545, %v1546
        %v1552 = vcombine.low %v1520, %v1529
        %v1553 = vcombine.low %v1538, %v1547
        %v1555 = vunpack.c.l.s4 1966171168
        %v1556 = vunpack.c.0.s8 %v1555
        %v1557 = vlaneseq
        %v1558 = vshrl.u32 %v1557, 7
        %v1559 = vsub.s32 %v1556, %v1558
        %v1560 = vrot.slane %v1552, %v1559
        %v1562 = vunpack.c.l.s4 1966171168
        %v1563 = vunpack.c.0.s8 %v1562
        %v1564 = vlaneseq
        %v1565 = vshrl.u32 %v1564, 7
        %v1566 = vsub.s32 %v1563, %v1565
        %v1567 = vrot.slane %v1553, %v1566
        %v1568 = vcombine.low %v1560, %v1567
        %v1570 = vunpack.c.l.s4 1966171168
        %v1571 = vunpack.c.0.s8 %v1570
        %v1572 = vlaneseq
        %v1573 = vshrl.u32 %v1572, 7
        %v1574 = vsub.s32 %v1571, %v1573
        %v1575 = vrot.slane %v1568, %v1574
        %v1577 = vadd.f32 %v1495, %v1575
        %1578 = vst.msk [vmem:[%s6] sm:$0xf] %vm1493, %v1577
        %s1579 = smul.u32 4, %s19
        %p1580 = scmp.lt.s32.totalorder %s1579, 11
        %s1581 = scalar_select %p1580, %s1579, 11
        %s1582 = smul.addr %s1581, 4
        %s1583 = smul.addr %s1582, 8
        %s1584 = scalar_lea.vmem %s4, %s1583
        // Predicated region
        $region45: #{generator_forward.4} parent=35 // pred_check
          %p1585 = pneg %p126
        $region46: #{generator_forward.4} parent=35 // pred_check_branch
          %1587 = sbr.rel (%p1585) target = $region48
        $region47: #{generator_forward.4} parent=35 // pred_region
          %s1588 = smul.u32 4, %s19
        $region48: #{generator_forward.4} parent=35 // pred_fallthru
          _
        // Predicated region
        $region49: #{generator_forward.4} parent=35 // pred_check
          %p1589 = pneg %p147
        $region50: #{generator_forward.4} parent=35 // pred_check_branch
          %1591 = sbr.rel (%p1589) target = $region52
        $region51: #{generator_forward.4} parent=35 // pred_region
          _
        $region52: #{generator_forward.4} parent=35 // pred_fallthru
          _
        // Predicated region
        $region53: #{generator_forward.4} parent=35 // pred_check
          %p1592 = pneg %p168
        $region54: #{generator_forward.4} parent=35 // pred_check_branch
          %1594 = sbr.rel (%p1592) target = $region56
        $region55: #{generator_forward.4} parent=35 // pred_region
          _
        $region56: #{generator_forward.4} parent=35 // pred_fallthru
          _
        // Predicated region
        $region57: #{generator_forward.4} parent=35 // pred_check
          %p1595 = pneg %p147
        $region58: #{generator_forward.4} parent=35 // pred_check_branch
          %1597 = sbr.rel (%p1595) target = $region60
        $region59: #{generator_forward.4} parent=35 // pred_region
          _
        $region60: #{generator_forward.4} parent=35 // pred_fallthru
          _
        // Predicated region
        $region61: #{generator_forward.4} parent=35 // pred_check
          %p1598 = pneg %p168
        $region62: #{generator_forward.4} parent=35 // pred_check_branch
          %1600 = sbr.rel (%p1598) target = $region64
        $region63: #{generator_forward.4} parent=35 // pred_region
          _
        $region64: #{generator_forward.4} parent=35 // pred_fallthru
          _
      $region36: #{generator_forward.4} parent=5 // pred_fallthru
        _
      %p1601 = scmp.le.s32.totalorder 2, %s14
      // Predicated region
      $region65: #{generator_forward.4} parent=5 // pred_check
        %p1602 = pneg %p1601
      $region66: #{generator_forward.4} parent=5 // pred_check_branch
        %1604 = sbr.rel (%p1602) target = $region68
      $region67: #{generator_forward.4} parent=5 // pred_region
        %s1605 = ssub.s32 %s14, 2
        // Predicated region
        $region69: #{generator_forward.4} parent=67 // pred_check
          %p1606 = pneg %p132
        $region70: #{generator_forward.4} parent=67 // pred_check_branch
          %1608 = sbr.rel (%p1606) target = $region72
        $region71: #{generator_forward.4} parent=67 // pred_region
          %s1609 = smul.u32 4, %s20
          %p1610 = scmp.lt.s32.totalorder %s1609, 11
          %s1611 = scalar_select %p1610, %s1609, 11
          %s1612 = smul.addr %s1611, 4
          %s1613 = smul.addr %s1612, 8
          %s1614 = scalar_lea.vmem %s4, %s1613
        $region72: #{generator_forward.4} parent=67 // pred_fallthru
          _
      $region68: #{generator_forward.4} parent=5 // pred_fallthru
        _
    $region6: #{generator_forward.4} parent=1 // loop_footer
      %s18 = sadd.s32 1, %s14
    $region7: #{generator_forward.4} parent=1 // loop_footer_branch
      %13 = sbr.rel target = $region3
    $region8: #{generator_forward.4} parent=1 // loop_exit
      _
    %1615 = vsyncpa [#allocation3], 1
    %s1616 = scalar_lea.sflag [#allocation3], 1
    %1617 = vsyncpa %s1616, 1

</llo_original>
